<compile_context>
chip_gen: v7x
topology: tpu7x:2x2x1
jax: 0.10.0
libtpu: 0.0.40
codegen_flags: <defaults>
</compile_context>

<pallas_src>
import functools

import jax
import jax.numpy as jnp
from jax.experimental import pallas as pl
from jax.experimental.pallas import tpu as pltpu

# MXU operand dtype (accumulation is always f32).  bf16 is the recommended
# production setting; flip to jnp.float32 for bit-tight (1e-4) checks.
MATMUL_DTYPE = jnp.bfloat16


def _pick_batch_block(batch, max_bb=8):
    """Largest Bb <= max_bb dividing batch that still leaves >= 2 grid steps
    (so both v7x TensorCores get work under "parallel" sharding)."""
    for bb in range(min(max_bb, batch), 0, -1):
        if batch % bb == 0 and batch // bb >= 2:
            return bb
    return 1


def resblock_kernel(x_ref, lmask_ref, rmask_ref,
                    w1_ref, b1_ref, w2_ref, b2_ref,
                    fc1wt_ref, fc1b_ref, fc2w_ref, fc2b_ref,
                    out_ref, pad_s, *, W):
    # x_ref   : (Bb, C, N) f32, unpadded flattened spatial, N = H*W
    # *mask   : (1, N) f32, 0.0 at the first / last image column of each row
    # w*_ref  : (9, C, C) MATMUL_DTYPE conv taps (t = kh*3 + kw); b*: (C,1) f32
    # pad_s   : (C, N + 2W + 2) MATMUL_DTYPE "wrapped flat" zero-halo buffer
    Bb, C, N = x_ref.shape
    off = W + 1                     # image lives at pad_s[:, off:off+N]
    inv_hw = 1.0 / N

    # Zero the halo buffer once per grid step.  All per-sample writes below
    # touch exactly [off, off+N), so the zero head/tail rows stay zero for
    # every sample and every conv in this step.
    pad_s[...] = jnp.zeros_like(pad_s)

    lmask = lmask_ref[...]          # (1, N)
    rmask = rmask_ref[...]          # (1, N)
    b1 = b1_ref[...]
    b2 = b2_ref[...]
    fc1wt = fc1wt_ref[...]          # (C, Csq)
    fc1b = fc1b_ref[...]            # (1, Csq)
    fc2w = fc2w_ref[...]            # (2C, Csq)
    fc2b = fc2b_ref[...]            # (2C, 1)

    def tap_group(w_ref, kw):
        """Sum of the 3 taps in kernel-column kw: 3 direct MXU dots, f32 acc."""
        g = jnp.dot(w_ref[kw], pad_s[:, kw:kw + N],
                    preferred_element_type=jnp.float32)
        for kh in (1, 2):
            s = kh * W + kw
            g = g + jnp.dot(w_ref[kh * 3 + kw], pad_s[:, s:s + N],
                            preferred_element_type=jnp.float32)
        return g

    def conv3x3(w_ref, b):
        """3x3 'same' conv on the current pad_s contents, output (C, N) f32.
        The flat layout wraps horizontally across rows; lmask/rmask cancel
        the wrapped contributions of the kw=0 / kw=2 tap groups.
        NOTE(MXU): with M = C = 8 each dot streams very few rows per
        stationary tile; that is fine because this kernel is
        overhead/copy-bound, not MXU-bound.  If C grows to >= 64, revisit
        the operand orientation (stream patches against stationary weights).
        """
        return (tap_group(w_ref, 1)
                + lmask * tap_group(w_ref, 0)
                + rmask * tap_group(w_ref, 2)
                + b)

    for bi in range(Bb):            # Bb is static -> fully unrolled
        x = x_ref[bi]               # (C, N) f32

        # conv1 / conv2 inputs: one contiguous store each into the halo buffer.
        pad_s[:, off:off + N] = x.astype(pad_s.dtype)
        y1 = conv3x3(w1_ref, b1)                               # (C, N) f32
        pad_s[:, off:off + N] = y1.astype(pad_s.dtype)
        y2 = conv3x3(w2_ref, b2)                               # (C, N) f32

        # Squeeze & Excite: global average pool + two tiny FCs (f32).
        pooled = jnp.sum(y2, axis=1, keepdims=True) * inv_hw   # (C, 1)
        h1 = jnp.maximum(
            jnp.sum(fc1wt * pooled, axis=0, keepdims=True) + fc1b, 0.0)
        h2 = jnp.sum(fc2w * h1, axis=1, keepdims=True) + fc2b  # (2C, 1)
        w_gate = jax.nn.sigmoid(h2[:C, :])                     # (C, 1)
        b_gate = h2[C:, :]                                     # (C, 1)

        # Gate the ORIGINAL f32 input, residual add, ReLU.  N is a multiple
        # of 128 at these sizes -> unmasked lane-dense output stores.
        out_ref[bi] = jnp.maximum(x * w_gate + b_gate + x, 0.0)


def resblock_pallas(x_nchw, params):
    B, C, H, W = x_nchw.shape
    N = H * W
    L = N + 2 * W + 2            # flat image + zero row above/below + 1 col each side
    csq = params["fc1_w"].shape[0]

    x_flat = x_nchw.astype(jnp.float32).reshape(B, C, N)   # free reshape, no pad

    def tapw(w):                 # OIHW (C,C,3,3) -> (9, C, C), t = kh*3 + kw
        return jnp.transpose(w, (2, 3, 0, 1)).reshape(9, C, C).astype(MATMUL_DTYPE)

    w1, w2 = tapw(params["conv1_w"]), tapw(params["conv2_w"])
    b1 = params["conv1_b"].reshape(C, 1).astype(jnp.float32)
    b2 = params["conv2_b"].reshape(C, 1).astype(jnp.float32)
    fc1wt = params["fc1_w"].T.astype(jnp.float32)              # (C, Csq)
    fc1b = params["fc1_b"].reshape(1, csq).astype(jnp.float32)
    fc2w = params["fc2_w"].astype(jnp.float32)                 # (2C, Csq)
    fc2b = params["fc2_b"].reshape(2 * C, 1).astype(jnp.float32)

    # Masks cancelling the horizontal row-wrap of the flat layout.
    col = jnp.arange(N, dtype=jnp.int32) % W
    lmask = (col != 0).astype(jnp.float32).reshape(1, N)       # 0. at w == 0
    rmask = (col != W - 1).astype(jnp.float32).reshape(1, N)   # 0. at w == W-1

    Bb = _pick_batch_block(B)
    grid = (B // Bb,)

    def const(shape):
        nd = len(shape)
        return pl.BlockSpec(shape, lambda i, _nd=nd: (0,) * _nd)

    out_flat = pl.pallas_call(
        functools.partial(resblock_kernel, W=W),
        out_shape=jax.ShapeDtypeStruct((B, C, N), jnp.float32),
        grid=grid,
        in_specs=[
            pl.BlockSpec((Bb, C, N), lambda i: (i, 0, 0)),     # x (Bb samples)
            const((1, N)), const((1, N)),                      # left/right masks
            const((9, C, C)), const((C, 1)),                   # conv1
            const((9, C, C)), const((C, 1)),                   # conv2
            const((C, csq)), const((1, csq)),                  # fc1 (transposed)
            const((2 * C, csq)), const((2 * C, 1)),            # fc2
        ],
        out_specs=pl.BlockSpec((Bb, C, N), lambda i: (i, 0, 0)),
        scratch_shapes=[pltpu.VMEM((C, L), MATMUL_DTYPE)],      # zero-halo buffer
        compiler_params=pltpu.CompilerParams(
            dimension_semantics=("parallel",),
            vmem_limit_bytes=32 * 1024 * 1024),
    )(x_flat, lmask, rmask, w1, b1, w2, b2, fc1wt, fc1b, fc2w, fc2b)

    return out_flat.reshape(B, C, H, W)                         # free reshape


def resblock_reference(x_nchw, params):
    """Pure-JAX reference matching the PyTorch forward exactly (NCHW, f32)."""
    x = x_nchw.astype(jnp.float32)
    dn = ("NCHW", "OIHW", "NCHW")
    y = jax.lax.conv_general_dilated(x, params["conv1_w"], (1, 1),
                                     ((1, 1), (1, 1)), dimension_numbers=dn)
    y = y + params["conv1_b"][None, :, None, None]
    y = jax.lax.conv_general_dilated(y, params["conv2_w"], (1, 1),
                                     ((1, 1), (1, 1)), dimension_numbers=dn)
    y = y + params["conv2_b"][None, :, None, None]
    C = x.shape[1]
    pooled = jnp.mean(y, axis=(2, 3))
    h = jnp.maximum(pooled @ params["fc1_w"].T + params["fc1_b"], 0.0)
    p = h @ params["fc2_w"].T + params["fc2_b"]
    wg = jax.nn.sigmoid(p[:, :C])[:, :, None, None]
    bg = p[:, C:][:, :, None, None]
    return jnp.maximum(x * wg + bg + x, 0.0)


def init_params(key, channels, squeeze_rate=4):
    csq = int(channels // squeeze_rate)
    ks = jax.random.split(key, 8)
    s = 0.1
    return {
        "conv1_w": s * jax.random.normal(ks[0], (channels, channels, 3, 3), jnp.float32),
        "conv1_b": s * jax.random.normal(ks[1], (channels,), jnp.float32),
        "conv2_w": s * jax.random.normal(ks[2], (channels, channels, 3, 3), jnp.float32),
        "conv2_b": s * jax.random.normal(ks[3], (channels,), jnp.float32),
        "fc1_w": s * jax.random.normal(ks[4], (csq, channels), jnp.float32),
        "fc1_b": s * jax.random.normal(ks[5], (csq,), jnp.float32),
        "fc2_w": s * jax.random.normal(ks[6], (2 * channels, csq), jnp.float32),
        "fc2_b": s * jax.random.normal(ks[7], (2 * channels,), jnp.float32),
    }


if __name__ == "__main__":
    B, C, H, W = 2, 8, 16, 16                      # channels=8 -> squeeze dim 2
    key = jax.random.PRNGKey(0)
    kx, kp = jax.random.split(key)
    x = jax.random.normal(kx, (B, C, H, W), jnp.float32)   # NCHW like PyTorch
    params = init_params(kp, C)

    out = jax.block_until_ready(resblock_pallas(x, params))
    ref = jax.block_until_ready(resblock_reference(x, params))

    assert out.shape == (B, C, H, W)
    # bf16 MXU operands only perturb the SE gates (errors average out in the
    # global pool), so the forward stays well inside 2e-2 of the f32 reference.
    tol = 1e-4 if MATMUL_DTYPE == jnp.float32 else 2e-2
    assert jnp.allclose(out, ref, atol=tol, rtol=tol), \
        f"max abs err {jnp.max(jnp.abs(out - ref))}"
    print("KERNEL_OK")
</pallas_src>

<mosaic_0001>
module attributes {stable_mosaic.version = 11 : i64} {
  func.func @resblock_kernel(%arg0: i32, %arg1: memref<1x8x256xf32, #tpu.memory_space<vmem>>, %arg2: memref<1x256xf32, #tpu.memory_space<vmem>>, %arg3: memref<1x256xf32, #tpu.memory_space<vmem>>, %arg4: memref<9x8x8xbf16, #tpu.memory_space<vmem>>, %arg5: memref<8x1xf32, #tpu.memory_space<vmem>>, %arg6: memref<9x8x8xbf16, #tpu.memory_space<vmem>>, %arg7: memref<8x1xf32, #tpu.memory_space<vmem>>, %arg8: memref<8x2xf32, #tpu.memory_space<vmem>>, %arg9: memref<1x2xf32, #tpu.memory_space<vmem>>, %arg10: memref<16x2xf32, #tpu.memory_space<vmem>>, %arg11: memref<16x1xf32, #tpu.memory_space<vmem>>, %arg12: memref<1x8x256xf32, #tpu.memory_space<vmem>>, %arg13: memref<8x290xbf16, #tpu.memory_space<vmem>>) attributes {dimension_semantics = [#tpu.dimension_semantics<parallel>], iteration_bounds = array<i64: 2>, scalar_prefetch = 0 : i64, scratch_operands = 1 : i64, tpu.core_type = #tpu.core_type<tc>, window_params = [{transform_indices = @transform_0, window_bounds = array<i64: 1, 8, 256>}, {pipeline_mode = #tpu.pipeline_mode<synchronous>, transform_indices = @transform_1, window_bounds = array<i64: 1, 256>}, {pipeline_mode = #tpu.pipeline_mode<synchronous>, transform_indices = @transform_2, window_bounds = array<i64: 1, 256>}, {pipeline_mode = #tpu.pipeline_mode<synchronous>, transform_indices = @transform_3, window_bounds = array<i64: 9, 8, 8>}, {pipeline_mode = #tpu.pipeline_mode<synchronous>, transform_indices = @transform_4, window_bounds = array<i64: 8, 1>}, {pipeline_mode = #tpu.pipeline_mode<synchronous>, transform_indices = @transform_5, window_bounds = array<i64: 9, 8, 8>}, {pipeline_mode = #tpu.pipeline_mode<synchronous>, transform_indices = @transform_6, window_bounds = array<i64: 8, 1>}, {pipeline_mode = #tpu.pipeline_mode<synchronous>, transform_indices = @transform_7, window_bounds = array<i64: 8, 2>}, {pipeline_mode = #tpu.pipeline_mode<synchronous>, transform_indices = @transform_8, window_bounds = array<i64: 1, 2>}, {pipeline_mode = #tpu.pipeline_mode<synchronous>, transform_indices = @transform_9, window_bounds = array<i64: 16, 2>}, {pipeline_mode = #tpu.pipeline_mode<synchronous>, transform_indices = @transform_10, window_bounds = array<i64: 16, 1>}, {transform_indices = @transform_11, window_bounds = array<i64: 1, 8, 256>}]} {
    %cst = arith.constant 0.000000e+00 : bf16
    %0 = vector.broadcast %cst : bf16 to vector<8x290xbf16>
    %c0 = arith.constant 0 : index
    %c0_0 = arith.constant 0 : index
    %1 = vector.load %arg13[%c0, %c0_0] : memref<8x290xbf16, #tpu.memory_space<vmem>>, vector<8x290xbf16>
    tpu.vector_store %arg13[%c0, %c0_0], %0 {strides = array<i32>} : memref<8x290xbf16, #tpu.memory_space<vmem>>, vector<8x290xbf16>,
    %c0_1 = arith.constant 0 : index
    %c0_2 = arith.constant 0 : index
    %2 = vector.load %arg2[%c0_1, %c0_2] : memref<1x256xf32, #tpu.memory_space<vmem>>, vector<1x256xf32>
    %c0_3 = arith.constant 0 : index
    %c0_4 = arith.constant 0 : index
    %3 = vector.load %arg3[%c0_3, %c0_4] : memref<1x256xf32, #tpu.memory_space<vmem>>, vector<1x256xf32>
    %c0_5 = arith.constant 0 : index
    %c0_6 = arith.constant 0 : index
    %4 = vector.load %arg5[%c0_5, %c0_6] : memref<8x1xf32, #tpu.memory_space<vmem>>, vector<8x1xf32>
    %c0_7 = arith.constant 0 : index
    %c0_8 = arith.constant 0 : index
    %5 = vector.load %arg7[%c0_7, %c0_8] : memref<8x1xf32, #tpu.memory_space<vmem>>, vector<8x1xf32>
    %c0_9 = arith.constant 0 : index
    %c0_10 = arith.constant 0 : index
    %6 = vector.load %arg8[%c0_9, %c0_10] : memref<8x2xf32, #tpu.memory_space<vmem>>, vector<8x2xf32>
    %c0_11 = arith.constant 0 : index
    %c0_12 = arith.constant 0 : index
    %7 = vector.load %arg9[%c0_11, %c0_12] : memref<1x2xf32, #tpu.memory_space<vmem>>, vector<1x2xf32>
    %c0_13 = arith.constant 0 : index
    %c0_14 = arith.constant 0 : index
    %8 = vector.load %arg10[%c0_13, %c0_14] : memref<16x2xf32, #tpu.memory_space<vmem>>, vector<16x2xf32>
    %c0_15 = arith.constant 0 : index
    %c0_16 = arith.constant 0 : index
    %9 = vector.load %arg11[%c0_15, %c0_16] : memref<16x1xf32, #tpu.memory_space<vmem>>, vector<16x1xf32>
    %c0_17 = arith.constant 0 : index
    %c0_18 = arith.constant 0 : index
    %c0_19 = arith.constant 0 : index
    %10 = vector.load %arg1[%c0_17, %c0_18, %c0_19] : memref<1x8x256xf32, #tpu.memory_space<vmem>>, vector<1x8x256xf32>
    %11 = vector.shape_cast %10 : vector<1x8x256xf32> to vector<8x256xf32>
    %12 = arith.truncf %11 : vector<8x256xf32> to vector<8x256xbf16>
    %c0_20 = arith.constant 0 : index
    %c17 = arith.constant 17 : index
    %13 = vector.load %arg13[%c0_20, %c17] : memref<8x290xbf16, #tpu.memory_space<vmem>>, vector<8x256xbf16>
    tpu.vector_store %arg13[%c0_20, %c17], %12 {strides = array<i32>} : memref<8x290xbf16, #tpu.memory_space<vmem>>, vector<8x256xbf16>,
    %c1 = arith.constant 1 : index
    %c0_21 = arith.constant 0 : index
    %c0_22 = arith.constant 0 : index
    %14 = vector.load %arg4[%c1, %c0_21, %c0_22] : memref<9x8x8xbf16, #tpu.memory_space<vmem>>, vector<1x8x8xbf16>
    %15 = vector.shape_cast %14 : vector<1x8x8xbf16> to vector<8x8xbf16>
    %c0_23 = arith.constant 0 : index
    %c1_24 = arith.constant 1 : index
    %16 = vector.load %arg13[%c0_23, %c1_24] : memref<8x290xbf16, #tpu.memory_space<vmem>>, vector<8x256xbf16>
    %cst_25 = arith.constant dense<0.000000e+00> : vector<8x256xf32>
    %17 = tpu.matmul %15, %16, %cst_25 {dimension_numbers = #tpu.dot_dimension_numbers<[1], [0], [0], [1], [0, 0, 1, 1], [], []>} : vector<8x8xbf16>, vector<8x256xbf16>, vector<8x256xf32> -> vector<8x256xf32>
    %c4 = arith.constant 4 : index
    %c0_26 = arith.constant 0 : index
    %c0_27 = arith.constant 0 : index
    %18 = vector.load %arg4[%c4, %c0_26, %c0_27] : memref<9x8x8xbf16, #tpu.memory_space<vmem>>, vector<1x8x8xbf16>
    %19 = vector.shape_cast %18 : vector<1x8x8xbf16> to vector<8x8xbf16>
    %c0_28 = arith.constant 0 : index
    %c17_29 = arith.constant 17 : index
    %20 = vector.load %arg13[%c0_28, %c17_29] : memref<8x290xbf16, #tpu.memory_space<vmem>>, vector<8x256xbf16>
    %cst_30 = arith.constant dense<0.000000e+00> : vector<8x256xf32>
    %21 = tpu.matmul %19, %20, %cst_30 {dimension_numbers = #tpu.dot_dimension_numbers<[1], [0], [0], [1], [0, 0, 1, 1], [], []>} : vector<8x8xbf16>, vector<8x256xbf16>, vector<8x256xf32> -> vector<8x256xf32>
    %22 = arith.addf %17, %21 : vector<8x256xf32>
    %c7 = arith.constant 7 : index
    %c0_31 = arith.constant 0 : index
    %c0_32 = arith.constant 0 : index
    %23 = vector.load %arg4[%c7, %c0_31, %c0_32] : memref<9x8x8xbf16, #tpu.memory_space<vmem>>, vector<1x8x8xbf16>
    %24 = vector.shape_cast %23 : vector<1x8x8xbf16> to vector<8x8xbf16>
    %c0_33 = arith.constant 0 : index
    %c33 = arith.constant 33 : index
    %25 = vector.load %arg13[%c0_33, %c33] : memref<8x290xbf16, #tpu.memory_space<vmem>>, vector<8x256xbf16>
    %cst_34 = arith.constant dense<0.000000e+00> : vector<8x256xf32>
    %26 = tpu.matmul %24, %25, %cst_34 {dimension_numbers = #tpu.dot_dimension_numbers<[1], [0], [0], [1], [0, 0, 1, 1], [], []>} : vector<8x8xbf16>, vector<8x256xbf16>, vector<8x256xf32> -> vector<8x256xf32>
    %27 = arith.addf %22, %26 : vector<8x256xf32>
    %c0_35 = arith.constant 0 : index
    %c0_36 = arith.constant 0 : index
    %c0_37 = arith.constant 0 : index
    %28 = vector.load %arg4[%c0_35, %c0_36, %c0_37] : memref<9x8x8xbf16, #tpu.memory_space<vmem>>, vector<1x8x8xbf16>
    %29 = vector.shape_cast %28 : vector<1x8x8xbf16> to vector<8x8xbf16>
    %c0_38 = arith.constant 0 : index
    %c0_39 = arith.constant 0 : index
    %30 = vector.load %arg13[%c0_38, %c0_39] : memref<8x290xbf16, #tpu.memory_space<vmem>>, vector<8x256xbf16>
    %cst_40 = arith.constant dense<0.000000e+00> : vector<8x256xf32>
    %31 = tpu.matmul %29, %30, %cst_40 {dimension_numbers = #tpu.dot_dimension_numbers<[1], [0], [0], [1], [0, 0, 1, 1], [], []>} : vector<8x8xbf16>, vector<8x256xbf16>, vector<8x256xf32> -> vector<8x256xf32>
    %c3 = arith.constant 3 : index
    %c0_41 = arith.constant 0 : index
    %c0_42 = arith.constant 0 : index
    %32 = vector.load %arg4[%c3, %c0_41, %c0_42] : memref<9x8x8xbf16, #tpu.memory_space<vmem>>, vector<1x8x8xbf16>
    %33 = vector.shape_cast %32 : vector<1x8x8xbf16> to vector<8x8xbf16>
    %c0_43 = arith.constant 0 : index
    %c16 = arith.constant 16 : index
    %34 = vector.load %arg13[%c0_43, %c16] : memref<8x290xbf16, #tpu.memory_space<vmem>>, vector<8x256xbf16>
    %cst_44 = arith.constant dense<0.000000e+00> : vector<8x256xf32>
    %35 = tpu.matmul %33, %34, %cst_44 {dimension_numbers = #tpu.dot_dimension_numbers<[1], [0], [0], [1], [0, 0, 1, 1], [], []>} : vector<8x8xbf16>, vector<8x256xbf16>, vector<8x256xf32> -> vector<8x256xf32>
    %36 = arith.addf %31, %35 : vector<8x256xf32>
    %c6 = arith.constant 6 : index
    %c0_45 = arith.constant 0 : index
    %c0_46 = arith.constant 0 : index
    %37 = vector.load %arg4[%c6, %c0_45, %c0_46] : memref<9x8x8xbf16, #tpu.memory_space<vmem>>, vector<1x8x8xbf16>
    %38 = vector.shape_cast %37 : vector<1x8x8xbf16> to vector<8x8xbf16>
    %c0_47 = arith.constant 0 : index
    %c32 = arith.constant 32 : index
    %39 = vector.load %arg13[%c0_47, %c32] : memref<8x290xbf16, #tpu.memory_space<vmem>>, vector<8x256xbf16>
    %cst_48 = arith.constant dense<0.000000e+00> : vector<8x256xf32>
    %40 = tpu.matmul %38, %39, %cst_48 {dimension_numbers = #tpu.dot_dimension_numbers<[1], [0], [0], [1], [0, 0, 1, 1], [], []>} : vector<8x8xbf16>, vector<8x256xbf16>, vector<8x256xf32> -> vector<8x256xf32>
    %41 = arith.addf %36, %40 : vector<8x256xf32>
    %42 = vector.broadcast %2 : vector<1x256xf32> to vector<8x256xf32>
    %43 = arith.mulf %42, %41 : vector<8x256xf32>
    %44 = arith.addf %27, %43 : vector<8x256xf32>
    %c2 = arith.constant 2 : index
    %c0_49 = arith.constant 0 : index
    %c0_50 = arith.constant 0 : index
    %45 = vector.load %arg4[%c2, %c0_49, %c0_50] : memref<9x8x8xbf16, #tpu.memory_space<vmem>>, vector<1x8x8xbf16>
    %46 = vector.shape_cast %45 : vector<1x8x8xbf16> to vector<8x8xbf16>
    %c0_51 = arith.constant 0 : index
    %c2_52 = arith.constant 2 : index
    %47 = vector.load %arg13[%c0_51, %c2_52] : memref<8x290xbf16, #tpu.memory_space<vmem>>, vector<8x256xbf16>
    %cst_53 = arith.constant dense<0.000000e+00> : vector<8x256xf32>
    %48 = tpu.matmul %46, %47, %cst_53 {dimension_numbers = #tpu.dot_dimension_numbers<[1], [0], [0], [1], [0, 0, 1, 1], [], []>} : vector<8x8xbf16>, vector<8x256xbf16>, vector<8x256xf32> -> vector<8x256xf32>
    %c5 = arith.constant 5 : index
    %c0_54 = arith.constant 0 : index
    %c0_55 = arith.constant 0 : index
    %49 = vector.load %arg4[%c5, %c0_54, %c0_55] : memref<9x8x8xbf16, #tpu.memory_space<vmem>>, vector<1x8x8xbf16>
    %50 = vector.shape_cast %49 : vector<1x8x8xbf16> to vector<8x8xbf16>
    %c0_56 = arith.constant 0 : index
    %c18 = arith.constant 18 : index
    %51 = vector.load %arg13[%c0_56, %c18] : memref<8x290xbf16, #tpu.memory_space<vmem>>, vector<8x256xbf16>
    %cst_57 = arith.constant dense<0.000000e+00> : vector<8x256xf32>
    %52 = tpu.matmul %50, %51, %cst_57 {dimension_numbers = #tpu.dot_dimension_numbers<[1], [0], [0], [1], [0, 0, 1, 1], [], []>} : vector<8x8xbf16>, vector<8x256xbf16>, vector<8x256xf32> -> vector<8x256xf32>
    %53 = arith.addf %48, %52 : vector<8x256xf32>
    %c8 = arith.constant 8 : index
    %c0_58 = arith.constant 0 : index
    %c0_59 = arith.constant 0 : index
    %54 = vector.load %arg4[%c8, %c0_58, %c0_59] : memref<9x8x8xbf16, #tpu.memory_space<vmem>>, vector<1x8x8xbf16>
    %55 = vector.shape_cast %54 : vector<1x8x8xbf16> to vector<8x8xbf16>
    %c0_60 = arith.constant 0 : index
    %c34 = arith.constant 34 : index
    %56 = vector.load %arg13[%c0_60, %c34] : memref<8x290xbf16, #tpu.memory_space<vmem>>, vector<8x256xbf16>
    %cst_61 = arith.constant dense<0.000000e+00> : vector<8x256xf32>
    %57 = tpu.matmul %55, %56, %cst_61 {dimension_numbers = #tpu.dot_dimension_numbers<[1], [0], [0], [1], [0, 0, 1, 1], [], []>} : vector<8x8xbf16>, vector<8x256xbf16>, vector<8x256xf32> -> vector<8x256xf32>
    %58 = arith.addf %53, %57 : vector<8x256xf32>
    %59 = vector.broadcast %3 : vector<1x256xf32> to vector<8x256xf32>
    %60 = arith.mulf %59, %58 : vector<8x256xf32>
    %61 = arith.addf %44, %60 : vector<8x256xf32>
    %62 = vector.broadcast %4 : vector<8x1xf32> to vector<8x256xf32>
    %63 = arith.addf %61, %62 : vector<8x256xf32>
    %64 = arith.truncf %63 : vector<8x256xf32> to vector<8x256xbf16>
    %c0_62 = arith.constant 0 : index
    %c17_63 = arith.constant 17 : index
    %65 = vector.load %arg13[%c0_62, %c17_63] : memref<8x290xbf16, #tpu.memory_space<vmem>>, vector<8x256xbf16>
    tpu.vector_store %arg13[%c0_62, %c17_63], %64 {strides = array<i32>} : memref<8x290xbf16, #tpu.memory_space<vmem>>, vector<8x256xbf16>,
    %c1_64 = arith.constant 1 : index
    %c0_65 = arith.constant 0 : index
    %c0_66 = arith.constant 0 : index
    %66 = vector.load %arg6[%c1_64, %c0_65, %c0_66] : memref<9x8x8xbf16, #tpu.memory_space<vmem>>, vector<1x8x8xbf16>
    %67 = vector.shape_cast %66 : vector<1x8x8xbf16> to vector<8x8xbf16>
    %c0_67 = arith.constant 0 : index
    %c1_68 = arith.constant 1 : index
    %68 = vector.load %arg13[%c0_67, %c1_68] : memref<8x290xbf16, #tpu.memory_space<vmem>>, vector<8x256xbf16>
    %cst_69 = arith.constant dense<0.000000e+00> : vector<8x256xf32>
    %69 = tpu.matmul %67, %68, %cst_69 {dimension_numbers = #tpu.dot_dimension_numbers<[1], [0], [0], [1], [0, 0, 1, 1], [], []>} : vector<8x8xbf16>, vector<8x256xbf16>, vector<8x256xf32> -> vector<8x256xf32>
    %c4_70 = arith.constant 4 : index
    %c0_71 = arith.constant 0 : index
    %c0_72 = arith.constant 0 : index
    %70 = vector.load %arg6[%c4_70, %c0_71, %c0_72] : memref<9x8x8xbf16, #tpu.memory_space<vmem>>, vector<1x8x8xbf16>
    %71 = vector.shape_cast %70 : vector<1x8x8xbf16> to vector<8x8xbf16>
    %c0_73 = arith.constant 0 : index
    %c17_74 = arith.constant 17 : index
    %72 = vector.load %arg13[%c0_73, %c17_74] : memref<8x290xbf16, #tpu.memory_space<vmem>>, vector<8x256xbf16>
    %cst_75 = arith.constant dense<0.000000e+00> : vector<8x256xf32>
    %73 = tpu.matmul %71, %72, %cst_75 {dimension_numbers = #tpu.dot_dimension_numbers<[1], [0], [0], [1], [0, 0, 1, 1], [], []>} : vector<8x8xbf16>, vector<8x256xbf16>, vector<8x256xf32> -> vector<8x256xf32>
    %74 = arith.addf %69, %73 : vector<8x256xf32>
    %c7_76 = arith.constant 7 : index
    %c0_77 = arith.constant 0 : index
    %c0_78 = arith.constant 0 : index
    %75 = vector.load %arg6[%c7_76, %c0_77, %c0_78] : memref<9x8x8xbf16, #tpu.memory_space<vmem>>, vector<1x8x8xbf16>
    %76 = vector.shape_cast %75 : vector<1x8x8xbf16> to vector<8x8xbf16>
    %c0_79 = arith.constant 0 : index
    %c33_80 = arith.constant 33 : index
    %77 = vector.load %arg13[%c0_79, %c33_80] : memref<8x290xbf16, #tpu.memory_space<vmem>>, vector<8x256xbf16>
    %cst_81 = arith.constant dense<0.000000e+00> : vector<8x256xf32>
    %78 = tpu.matmul %76, %77, %cst_81 {dimension_numbers = #tpu.dot_dimension_numbers<[1], [0], [0], [1], [0, 0, 1, 1], [], []>} : vector<8x8xbf16>, vector<8x256xbf16>, vector<8x256xf32> -> vector<8x256xf32>
    %79 = arith.addf %74, %78 : vector<8x256xf32>
    %c0_82 = arith.constant 0 : index
    %c0_83 = arith.constant 0 : index
    %c0_84 = arith.constant 0 : index
    %80 = vector.load %arg6[%c0_82, %c0_83, %c0_84] : memref<9x8x8xbf16, #tpu.memory_space<vmem>>, vector<1x8x8xbf16>
    %81 = vector.shape_cast %80 : vector<1x8x8xbf16> to vector<8x8xbf16>
    %c0_85 = arith.constant 0 : index
    %c0_86 = arith.constant 0 : index
    %82 = vector.load %arg13[%c0_85, %c0_86] : memref<8x290xbf16, #tpu.memory_space<vmem>>, vector<8x256xbf16>
    %cst_87 = arith.constant dense<0.000000e+00> : vector<8x256xf32>
    %83 = tpu.matmul %81, %82, %cst_87 {dimension_numbers = #tpu.dot_dimension_numbers<[1], [0], [0], [1], [0, 0, 1, 1], [], []>} : vector<8x8xbf16>, vector<8x256xbf16>, vector<8x256xf32> -> vector<8x256xf32>
    %c3_88 = arith.constant 3 : index
    %c0_89 = arith.constant 0 : index
    %c0_90 = arith.constant 0 : index
    %84 = vector.load %arg6[%c3_88, %c0_89, %c0_90] : memref<9x8x8xbf16, #tpu.memory_space<vmem>>, vector<1x8x8xbf16>
    %85 = vector.shape_cast %84 : vector<1x8x8xbf16> to vector<8x8xbf16>
    %c0_91 = arith.constant 0 : index
    %c16_92 = arith.constant 16 : index
    %86 = vector.load %arg13[%c0_91, %c16_92] : memref<8x290xbf16, #tpu.memory_space<vmem>>, vector<8x256xbf16>
    %cst_93 = arith.constant dense<0.000000e+00> : vector<8x256xf32>
    %87 = tpu.matmul %85, %86, %cst_93 {dimension_numbers = #tpu.dot_dimension_numbers<[1], [0], [0], [1], [0, 0, 1, 1], [], []>} : vector<8x8xbf16>, vector<8x256xbf16>, vector<8x256xf32> -> vector<8x256xf32>
    %88 = arith.addf %83, %87 : vector<8x256xf32>
    %c6_94 = arith.constant 6 : index
    %c0_95 = arith.constant 0 : index
    %c0_96 = arith.constant 0 : index
    %89 = vector.load %arg6[%c6_94, %c0_95, %c0_96] : memref<9x8x8xbf16, #tpu.memory_space<vmem>>, vector<1x8x8xbf16>
    %90 = vector.shape_cast %89 : vector<1x8x8xbf16> to vector<8x8xbf16>
    %c0_97 = arith.constant 0 : index
    %c32_98 = arith.constant 32 : index
    %91 = vector.load %arg13[%c0_97, %c32_98] : memref<8x290xbf16, #tpu.memory_space<vmem>>, vector<8x256xbf16>
    %cst_99 = arith.constant dense<0.000000e+00> : vector<8x256xf32>
    %92 = tpu.matmul %90, %91, %cst_99 {dimension_numbers = #tpu.dot_dimension_numbers<[1], [0], [0], [1], [0, 0, 1, 1], [], []>} : vector<8x8xbf16>, vector<8x256xbf16>, vector<8x256xf32> -> vector<8x256xf32>
    %93 = arith.addf %88, %92 : vector<8x256xf32>
    %94 = vector.broadcast %2 : vector<1x256xf32> to vector<8x256xf32>
    %95 = arith.mulf %94, %93 : vector<8x256xf32>
    %96 = arith.addf %79, %95 : vector<8x256xf32>
    %c2_100 = arith.constant 2 : index
    %c0_101 = arith.constant 0 : index
    %c0_102 = arith.constant 0 : index
    %97 = vector.load %arg6[%c2_100, %c0_101, %c0_102] : memref<9x8x8xbf16, #tpu.memory_space<vmem>>, vector<1x8x8xbf16>
    %98 = vector.shape_cast %97 : vector<1x8x8xbf16> to vector<8x8xbf16>
    %c0_103 = arith.constant 0 : index
    %c2_104 = arith.constant 2 : index
    %99 = vector.load %arg13[%c0_103, %c2_104] : memref<8x290xbf16, #tpu.memory_space<vmem>>, vector<8x256xbf16>
    %cst_105 = arith.constant dense<0.000000e+00> : vector<8x256xf32>
    %100 = tpu.matmul %98, %99, %cst_105 {dimension_numbers = #tpu.dot_dimension_numbers<[1], [0], [0], [1], [0, 0, 1, 1], [], []>} : vector<8x8xbf16>, vector<8x256xbf16>, vector<8x256xf32> -> vector<8x256xf32>
    %c5_106 = arith.constant 5 : index
    %c0_107 = arith.constant 0 : index
    %c0_108 = arith.constant 0 : index
    %101 = vector.load %arg6[%c5_106, %c0_107, %c0_108] : memref<9x8x8xbf16, #tpu.memory_space<vmem>>, vector<1x8x8xbf16>
    %102 = vector.shape_cast %101 : vector<1x8x8xbf16> to vector<8x8xbf16>
    %c0_109 = arith.constant 0 : index
    %c18_110 = arith.constant 18 : index
    %103 = vector.load %arg13[%c0_109, %c18_110] : memref<8x290xbf16, #tpu.memory_space<vmem>>, vector<8x256xbf16>
    %cst_111 = arith.constant dense<0.000000e+00> : vector<8x256xf32>
    %104 = tpu.matmul %102, %103, %cst_111 {dimension_numbers = #tpu.dot_dimension_numbers<[1], [0], [0], [1], [0, 0, 1, 1], [], []>} : vector<8x8xbf16>, vector<8x256xbf16>, vector<8x256xf32> -> vector<8x256xf32>
    %105 = arith.addf %100, %104 : vector<8x256xf32>
    %c8_112 = arith.constant 8 : index
    %c0_113 = arith.constant 0 : index
    %c0_114 = arith.constant 0 : index
    %106 = vector.load %arg6[%c8_112, %c0_113, %c0_114] : memref<9x8x8xbf16, #tpu.memory_space<vmem>>, vector<1x8x8xbf16>
    %107 = vector.shape_cast %106 : vector<1x8x8xbf16> to vector<8x8xbf16>
    %c0_115 = arith.constant 0 : index
    %c34_116 = arith.constant 34 : index
    %108 = vector.load %arg13[%c0_115, %c34_116] : memref<8x290xbf16, #tpu.memory_space<vmem>>, vector<8x256xbf16>
    %cst_117 = arith.constant dense<0.000000e+00> : vector<8x256xf32>
    %109 = tpu.matmul %107, %108, %cst_117 {dimension_numbers = #tpu.dot_dimension_numbers<[1], [0], [0], [1], [0, 0, 1, 1], [], []>} : vector<8x8xbf16>, vector<8x256xbf16>, vector<8x256xf32> -> vector<8x256xf32>
    %110 = arith.addf %105, %109 : vector<8x256xf32>
    %111 = vector.broadcast %3 : vector<1x256xf32> to vector<8x256xf32>
    %112 = arith.mulf %111, %110 : vector<8x256xf32>
    %113 = arith.addf %96, %112 : vector<8x256xf32>
    %114 = vector.broadcast %5 : vector<8x1xf32> to vector<8x256xf32>
    %115 = arith.addf %113, %114 : vector<8x256xf32>
    %cst_118 = arith.constant dense<0.000000e+00> : vector<8xf32>
    %116 = vector.multi_reduction <add>, %115, %cst_118 [1] : vector<8x256xf32> to vector<8xf32>
    %117 = vector.shape_cast %116 : vector<8xf32> to vector<8x1xf32>
    %cst_119 = arith.constant 3.906250e-03 : f32
    %118 = vector.broadcast %cst_119 : f32 to vector<8x1xf32>
    %119 = arith.mulf %117, %118 : vector<8x1xf32>
    %120 = vector.broadcast %119 : vector<8x1xf32> to vector<8x2xf32>
    %121 = arith.mulf %6, %120 : vector<8x2xf32>
    %cst_120 = arith.constant dense<0.000000e+00> : vector<2xf32>
    %122 = vector.multi_reduction <add>, %121, %cst_120 [0] : vector<8x2xf32> to vector<2xf32>
    %123 = vector.shape_cast %122 : vector<2xf32> to vector<1x2xf32>
    %124 = arith.addf %123, %7 : vector<1x2xf32>
    %cst_121 = arith.constant 0.000000e+00 : f32
    %125 = vector.broadcast %cst_121 : f32 to vector<1x2xf32>
    %126 = arith.maximumf %124, %125 : vector<1x2xf32>
    %127 = vector.broadcast %126 : vector<1x2xf32> to vector<16x2xf32>
    %128 = arith.mulf %8, %127 : vector<16x2xf32>
    %cst_122 = arith.constant dense<0.000000e+00> : vector<16xf32>
    %129 = vector.multi_reduction <add>, %128, %cst_122 [1] : vector<16x2xf32> to vector<16xf32>
    %130 = vector.shape_cast %129 : vector<16xf32> to vector<16x1xf32>
    %131 = arith.addf %130, %9 : vector<16x1xf32>
    %132 = vector.extract_strided_slice %131 {offsets = [0, 0], sizes = [8, 1], strides = [1, 1]} : vector<16x1xf32> to vector<8x1xf32>
    %133 = arith.negf %132 : vector<8x1xf32>
    %134 = math.exp %133 : vector<8x1xf32>
    %cst_123 = arith.constant 1.000000e+00 : f32
    %135 = vector.broadcast %cst_123 : f32 to vector<8x1xf32>
    %136 = arith.addf %135, %134 : vector<8x1xf32>
    %137 = arith.divf %135, %136 : vector<8x1xf32>
    %138 = vector.extract_strided_slice %131 {offsets = [8, 0], sizes = [8, 1], strides = [1, 1]} : vector<16x1xf32> to vector<8x1xf32>
    %139 = vector.broadcast %137 : vector<8x1xf32> to vector<8x256xf32>
    %140 = arith.mulf %11, %139 : vector<8x256xf32>
    %141 = vector.broadcast %138 : vector<8x1xf32> to vector<8x256xf32>
    %142 = arith.addf %140, %141 : vector<8x256xf32>
    %143 = arith.addf %142, %11 : vector<8x256xf32>
    %cst_124 = arith.constant 0.000000e+00 : f32
    %144 = vector.broadcast %cst_124 : f32 to vector<8x256xf32>
    %145 = arith.maximumf %143, %144 : vector<8x256xf32>
    %c0_125 = arith.constant 0 : index
    %c0_126 = arith.constant 0 : index
    %c0_127 = arith.constant 0 : index
    %146 = vector.load %arg12[%c0_125, %c0_126, %c0_127] : memref<1x8x256xf32, #tpu.memory_space<vmem>>, vector<1x8x256xf32>
    %147 = vector.shape_cast %146 : vector<1x8x256xf32> to vector<8x256xf32>
    %148 = vector.shape_cast %145 : vector<8x256xf32> to vector<1x8x256xf32>
    tpu.vector_store %arg12[%c0_125, %c0_126, %c0_127], %148 {strides = array<i32>} : memref<1x8x256xf32, #tpu.memory_space<vmem>>, vector<1x8x256xf32>,
    return
  }
  func.func @transform_0(%arg0: i32) -> (i32, i32, i32) {
    %c0_i32 = arith.constant 0 : i32
    %c0_i32_0 = arith.constant 0 : i32
    %c0_i32_1 = arith.constant 0 : i32
    return %arg0, %c0_i32, %c0_i32_0 : i32, i32, i32
  }
  func.func @transform_1(%arg0: i32) -> (i32, i32) {
    %c0_i32 = arith.constant 0 : i32
    %c0_i32_0 = arith.constant 0 : i32
    %c0_i32_1 = arith.constant 0 : i32
    return %c0_i32, %c0_i32_0 : i32, i32
  }
  func.func @transform_2(%arg0: i32) -> (i32, i32) {
    %c0_i32 = arith.constant 0 : i32
    %c0_i32_0 = arith.constant 0 : i32
    %c0_i32_1 = arith.constant 0 : i32
    return %c0_i32, %c0_i32_0 : i32, i32
  }
  func.func @transform_3(%arg0: i32) -> (i32, i32, i32) {
    %c0_i32 = arith.constant 0 : i32
    %c0_i32_0 = arith.constant 0 : i32
    %c0_i32_1 = arith.constant 0 : i32
    %c0_i32_2 = arith.constant 0 : i32
    return %c0_i32, %c0_i32_0, %c0_i32_1 : i32, i32, i32
  }
  func.func @transform_4(%arg0: i32) -> (i32, i32) {
    %c0_i32 = arith.constant 0 : i32
    %c0_i32_0 = arith.constant 0 : i32
    %c0_i32_1 = arith.constant 0 : i32
    return %c0_i32, %c0_i32_0 : i32, i32
  }
  func.func @transform_5(%arg0: i32) -> (i32, i32, i32) {
    %c0_i32 = arith.constant 0 : i32
    %c0_i32_0 = arith.constant 0 : i32
    %c0_i32_1 = arith.constant 0 : i32
    %c0_i32_2 = arith.constant 0 : i32
    return %c0_i32, %c0_i32_0, %c0_i32_1 : i32, i32, i32
  }
  func.func @transform_6(%arg0: i32) -> (i32, i32) {
    %c0_i32 = arith.constant 0 : i32
    %c0_i32_0 = arith.constant 0 : i32
    %c0_i32_1 = arith.constant 0 : i32
    return %c0_i32, %c0_i32_0 : i32, i32
  }
  func.func @transform_7(%arg0: i32) -> (i32, i32) {
    %c0_i32 = arith.constant 0 : i32
    %c0_i32_0 = arith.constant 0 : i32
    %c0_i32_1 = arith.constant 0 : i32
    return %c0_i32, %c0_i32_0 : i32, i32
  }
  func.func @transform_8(%arg0: i32) -> (i32, i32) {
    %c0_i32 = arith.constant 0 : i32
    %c0_i32_0 = arith.constant 0 : i32
    %c0_i32_1 = arith.constant 0 : i32
    return %c0_i32, %c0_i32_0 : i32, i32
  }
  func.func @transform_9(%arg0: i32) -> (i32, i32) {
    %c0_i32 = arith.constant 0 : i32
    %c0_i32_0 = arith.constant 0 : i32
    %c0_i32_1 = arith.constant 0 : i32
    return %c0_i32, %c0_i32_0 : i32, i32
  }
  func.func @transform_10(%arg0: i32) -> (i32, i32) {
    %c0_i32 = arith.constant 0 : i32
    %c0_i32_0 = arith.constant 0 : i32
    %c0_i32_1 = arith.constant 0 : i32
    return %c0_i32, %c0_i32_0 : i32, i32
  }
  func.func @transform_11(%arg0: i32) -> (i32, i32, i32) {
    %c0_i32 = arith.constant 0 : i32
    %c0_i32_0 = arith.constant 0 : i32
    %c0_i32_1 = arith.constant 0 : i32
    return %arg0, %c0_i32, %c0_i32_0 : i32, i32, i32
  }
}

</mosaic_0001>

<llo_original>
// kernel: tpu_custom_call.1
$region0: #{tpu_custom_call.1}
  #allocation0 [shape = 'u32[]', space=smem, size = 0x4, offset = 0x4, fixed_abs, tag = 'smem constant byte address 0x4 - core index']
  #allocation1 [shape = 'u32[144,128]{1,0:T(1,128)}', space=vmem, size = 0x12000, scoped, tag = 'internal scratch']
  #allocation2 [shape = 'bf16[8,290]{1,0:T(8,128)(2,1)}', space=vmem, size = 0x1800, scoped, tag = 'scratch operand']
  %s0 = inlined_call_operand.vmem [shape: f32[2,8,256], index: 0, kind: input, shape index: {}]
  %s1 = inlined_call_operand.vmem [shape: f32[1,256], index: 1, kind: input, shape index: {}]
  %s2 = inlined_call_operand.vmem [shape: f32[1,256], index: 2, kind: input, shape index: {}]
  %s3 = inlined_call_operand.vmem [shape: bf16[9,8,8], index: 3, kind: input, shape index: {}]
  %s4 = inlined_call_operand.vmem [shape: f32[8,1], index: 4, kind: input, shape index: {}]
  %s5 = inlined_call_operand.vmem [shape: bf16[9,8,8], index: 5, kind: input, shape index: {}]
  %s6 = inlined_call_operand.vmem [shape: f32[8,1], index: 6, kind: input, shape index: {}]
  %s7 = inlined_call_operand.vmem [shape: f32[8,2], index: 7, kind: input, shape index: {}]
  %s8 = inlined_call_operand.vmem [shape: f32[1,2], index: 8, kind: input, shape index: {}]
  %s9 = inlined_call_operand.vmem [shape: f32[16,2], index: 9, kind: input, shape index: {}]
  %s10 = inlined_call_operand.vmem [shape: f32[16,1], index: 10, kind: input, shape index: {}]
  %s11 = inlined_call_operand.hbm [shape: f32[2,8,256], index: 11, kind: output, shape index: {}]
  %s12 = sld [smem:[#allocation0]]
  $region77: #{tpu_custom_call.1} parent=0
    _
  %s14 = ssub.s32 1, %s12
  %s15 = scalar_select 0, %s14, %s12
  $region1: #{tpu_custom_call.1} parent=0
    #allocation3 [shape = 'u8[16384]{0}', space=vmem, size = 0x4000, scoped, tag = 'output window, operand 0']
    #allocation4 [shape = 's32[2]{0}', space=sflag, size = 0x8, scoped, tag = 'scoped memory for tpu_custom_call.1']
    %16 = vsyncpa [#allocation4], 0
    %s17 = scalar_lea.sflag [#allocation4], 1
    %18 = vsyncpa %s17, 0
    loop: start=0, step=1, limit=4
    $region2: #{tpu_custom_call.1} parent=1 // loop_pre_header
      _
    $region3: #{tpu_custom_call.1} parent=1 // loop_header
      %s20 = sphi 0, %s24
      %p21 = scmp.ge.s32.totalorder %s20, 4
      %s30 = sphi 0, %s32
      %s33 = sphi 0, %s30
      %s34 = sphi 0, %s33
      %s50 = sphi 0, %s34
      %s54 = sphi 0, %s54
      %s56 = sphi 0, %s54
      %s57 = sphi 0, %s56
      %s71 = sphi 0, %s57
      %s75 = sphi 0, %s75
      %s77 = sphi 0, %s75
      %s78 = sphi 0, %s77
      %s92 = sphi 0, %s78
      %s96 = sphi 0, %s96
      %s98 = sphi 0, %s96
      %s99 = sphi 0, %s98
      %s113 = sphi 0, %s99
      %s117 = sphi 0, %s117
      %s119 = sphi 0, %s117
      %s120 = sphi 0, %s119
      %s134 = sphi 0, %s120
      %s138 = sphi 0, %s138
      %s140 = sphi 0, %s138
      %s141 = sphi 0, %s140
      %s155 = sphi 0, %s141
      %s159 = sphi 0, %s159
      %s161 = sphi 0, %s159
      %s162 = sphi 0, %s161
      %s176 = sphi 0, %s162
      %s180 = sphi 0, %s180
      %s182 = sphi 0, %s180
      %s183 = sphi 0, %s182
      %s197 = sphi 0, %s183
      %s201 = sphi 0, %s201
      %s203 = sphi 0, %s201
      %s204 = sphi 0, %s203
      %s218 = sphi 0, %s204
      %s222 = sphi 0, %s222
      %s224 = sphi 0, %s222
      %s225 = sphi 0, %s224
      %s239 = sphi 0, %s225
      %s243 = sphi 0, %s243
      %s245 = sphi 0, %s243
      %s246 = sphi 0, %s245
      %s260 = sphi 0, %s246
      %s266 = sphi 0, %s268
      %s269 = sphi 0, %s266
      %s270 = sphi 0, %s269
      %s286 = sphi 0, %s270
    $region4: #{tpu_custom_call.1} parent=1 // loop_header_branch
      %23 = sbr.rel (%p21) target = $region8
    $region5: #{tpu_custom_call.1} parent=1 // loop_body
      %s25 = ssub.s32 %s20, 1
      %s26 = ssub.s32 %s20, 2
      %s27 = sadd.s32 %s20, 1
      %s28 = ssub.s32 %s20, %s27
      %p29 = scmp.eq.s32.totalorder %s28, 0
      %s31 = sadd.s32 %s30, 1
      %s32 = scalar_select %p29, %s30, %s31
      %p35 = pneg %p29
      %p36 = scmp.eq.s32.totalorder %s20, 1
      %p37 = por %p35, %p36
      %p38 = scmp.ne.s32.totalorder %s30, %s33
      %p39 = scmp.eq.s32.totalorder %s20, 0
      %p40 = por %p38, %p39
      %p41 = scmp.ne.s32.totalorder %s30, %s33
      %p42 = scmp.eq.s32.totalorder %s25, 1
      %p43 = por %p41, %p42
      %p44 = scmp.ne.s32.totalorder %s33, %s34
      %p45 = scmp.eq.s32.totalorder %s25, 0
      %p46 = por %p44, %p45
      %p47 = scmp.ne.s32.totalorder %s33, %s34
      %p48 = scmp.eq.s32.totalorder %s26, 1
      %p49 = por %p47, %p48
      %p51 = scmp.ne.s32.totalorder %s34, %s50
      %p52 = scmp.eq.s32.totalorder %s26, 0
      %p53 = por %p51, %p52
      %s55 = sadd.s32 %s54, 1
      %p58 = scmp.eq.s32.totalorder %s20, 1
      %p59 = scmp.ne.s32.totalorder %s54, %s56
      %p60 = scmp.eq.s32.totalorder %s20, 0
      %p61 = por %p59, %p60
      %p62 = scmp.ne.s32.totalorder %s54, %s56
      %p63 = scmp.eq.s32.totalorder %s25, 1
      %p64 = por %p62, %p63
      %p65 = scmp.ne.s32.totalorder %s56, %s57
      %p66 = scmp.eq.s32.totalorder %s25, 0
      %p67 = por %p65, %p66
      %p68 = scmp.ne.s32.totalorder %s56, %s57
      %p69 = scmp.eq.s32.totalorder %s26, 1
      %p70 = por %p68, %p69
      %p72 = scmp.ne.s32.totalorder %s57, %s71
      %p73 = scmp.eq.s32.totalorder %s26, 0
      %p74 = por %p72, %p73
      %s76 = sadd.s32 %s75, 1
      %p79 = scmp.eq.s32.totalorder %s20, 1
      %p80 = scmp.ne.s32.totalorder %s75, %s77
      %p81 = scmp.eq.s32.totalorder %s20, 0
      %p82 = por %p80, %p81
      %p83 = scmp.ne.s32.totalorder %s75, %s77
      %p84 = scmp.eq.s32.totalorder %s25, 1
      %p85 = por %p83, %p84
      %p86 = scmp.ne.s32.totalorder %s77, %s78
      %p87 = scmp.eq.s32.totalorder %s25, 0
      %p88 = por %p86, %p87
      %p89 = scmp.ne.s32.totalorder %s77, %s78
      %p90 = scmp.eq.s32.totalorder %s26, 1
      %p91 = por %p89, %p90
      %p93 = scmp.ne.s32.totalorder %s78, %s92
      %p94 = scmp.eq.s32.totalorder %s26, 0
      %p95 = por %p93, %p94
      %s97 = sadd.s32 %s96, 1
      %p100 = scmp.eq.s32.totalorder %s20, 1
      %p101 = scmp.ne.s32.totalorder %s96, %s98
      %p102 = scmp.eq.s32.totalorder %s20, 0
      %p103 = por %p101, %p102
      %p104 = scmp.ne.s32.totalorder %s96, %s98
      %p105 = scmp.eq.s32.totalorder %s25, 1
      %p106 = por %p104, %p105
      %p107 = scmp.ne.s32.totalorder %s98, %s99
      %p108 = scmp.eq.s32.totalorder %s25, 0
      %p109 = por %p107, %p108
      %p110 = scmp.ne.s32.totalorder %s98, %s99
      %p111 = scmp.eq.s32.totalorder %s26, 1
      %p112 = por %p110, %p111
      %p114 = scmp.ne.s32.totalorder %s99, %s113
      %p115 = scmp.eq.s32.totalorder %s26, 0
      %p116 = por %p114, %p115
      %s118 = sadd.s32 %s117, 1
      %p121 = scmp.eq.s32.totalorder %s20, 1
      %p122 = scmp.ne.s32.totalorder %s117, %s119
      %p123 = scmp.eq.s32.totalorder %s20, 0
      %p124 = por %p122, %p123
      %p125 = scmp.ne.s32.totalorder %s117, %s119
      %p126 = scmp.eq.s32.totalorder %s25, 1
      %p127 = por %p125, %p126
      %p128 = scmp.ne.s32.totalorder %s119, %s120
      %p129 = scmp.eq.s32.totalorder %s25, 0
      %p130 = por %p128, %p129
      %p131 = scmp.ne.s32.totalorder %s119, %s120
      %p132 = scmp.eq.s32.totalorder %s26, 1
      %p133 = por %p131, %p132
      %p135 = scmp.ne.s32.totalorder %s120, %s134
      %p136 = scmp.eq.s32.totalorder %s26, 0
      %p137 = por %p135, %p136
      %s139 = sadd.s32 %s138, 1
      %p142 = scmp.eq.s32.totalorder %s20, 1
      %p143 = scmp.ne.s32.totalorder %s138, %s140
      %p144 = scmp.eq.s32.totalorder %s20, 0
      %p145 = por %p143, %p144
      %p146 = scmp.ne.s32.totalorder %s138, %s140
      %p147 = scmp.eq.s32.totalorder %s25, 1
      %p148 = por %p146, %p147
      %p149 = scmp.ne.s32.totalorder %s140, %s141
      %p150 = scmp.eq.s32.totalorder %s25, 0
      %p151 = por %p149, %p150
      %p152 = scmp.ne.s32.totalorder %s140, %s141
      %p153 = scmp.eq.s32.totalorder %s26, 1
      %p154 = por %p152, %p153
      %p156 = scmp.ne.s32.totalorder %s141, %s155
      %p157 = scmp.eq.s32.totalorder %s26, 0
      %p158 = por %p156, %p157
      %s160 = sadd.s32 %s159, 1
      %p163 = scmp.eq.s32.totalorder %s20, 1
      %p164 = scmp.ne.s32.totalorder %s159, %s161
      %p165 = scmp.eq.s32.totalorder %s20, 0
      %p166 = por %p164, %p165
      %p167 = scmp.ne.s32.totalorder %s159, %s161
      %p168 = scmp.eq.s32.totalorder %s25, 1
      %p169 = por %p167, %p168
      %p170 = scmp.ne.s32.totalorder %s161, %s162
      %p171 = scmp.eq.s32.totalorder %s25, 0
      %p172 = por %p170, %p171
      %p173 = scmp.ne.s32.totalorder %s161, %s162
      %p174 = scmp.eq.s32.totalorder %s26, 1
      %p175 = por %p173, %p174
      %p177 = scmp.ne.s32.totalorder %s162, %s176
      %p178 = scmp.eq.s32.totalorder %s26, 0
      %p179 = por %p177, %p178
      %s181 = sadd.s32 %s180, 1
      %p184 = scmp.eq.s32.totalorder %s20, 1
      %p185 = scmp.ne.s32.totalorder %s180, %s182
      %p186 = scmp.eq.s32.totalorder %s20, 0
      %p187 = por %p185, %p186
      %p188 = scmp.ne.s32.totalorder %s180, %s182
      %p189 = scmp.eq.s32.totalorder %s25, 1
      %p190 = por %p188, %p189
      %p191 = scmp.ne.s32.totalorder %s182, %s183
      %p192 = scmp.eq.s32.totalorder %s25, 0
      %p193 = por %p191, %p192
      %p194 = scmp.ne.s32.totalorder %s182, %s183
      %p195 = scmp.eq.s32.totalorder %s26, 1
      %p196 = por %p194, %p195
      %p198 = scmp.ne.s32.totalorder %s183, %s197
      %p199 = scmp.eq.s32.totalorder %s26, 0
      %p200 = por %p198, %p199
      %s202 = sadd.s32 %s201, 1
      %p205 = scmp.eq.s32.totalorder %s20, 1
      %p206 = scmp.ne.s32.totalorder %s201, %s203
      %p207 = scmp.eq.s32.totalorder %s20, 0
      %p208 = por %p206, %p207
      %p209 = scmp.ne.s32.totalorder %s201, %s203
      %p210 = scmp.eq.s32.totalorder %s25, 1
      %p211 = por %p209, %p210
      %p212 = scmp.ne.s32.totalorder %s203, %s204
      %p213 = scmp.eq.s32.totalorder %s25, 0
      %p214 = por %p212, %p213
      %p215 = scmp.ne.s32.totalorder %s203, %s204
      %p216 = scmp.eq.s32.totalorder %s26, 1
      %p217 = por %p215, %p216
      %p219 = scmp.ne.s32.totalorder %s204, %s218
      %p220 = scmp.eq.s32.totalorder %s26, 0
      %p221 = por %p219, %p220
      %s223 = sadd.s32 %s222, 1
      %p226 = scmp.eq.s32.totalorder %s20, 1
      %p227 = scmp.ne.s32.totalorder %s222, %s224
      %p228 = scmp.eq.s32.totalorder %s20, 0
      %p229 = por %p227, %p228
      %p230 = scmp.ne.s32.totalorder %s222, %s224
      %p231 = scmp.eq.s32.totalorder %s25, 1
      %p232 = por %p230, %p231
      %p233 = scmp.ne.s32.totalorder %s224, %s225
      %p234 = scmp.eq.s32.totalorder %s25, 0
      %p235 = por %p233, %p234
      %p236 = scmp.ne.s32.totalorder %s224, %s225
      %p237 = scmp.eq.s32.totalorder %s26, 1
      %p238 = por %p236, %p237
      %p240 = scmp.ne.s32.totalorder %s225, %s239
      %p241 = scmp.eq.s32.totalorder %s26, 0
      %p242 = por %p240, %p241
      %s244 = sadd.s32 %s243, 1
      %p247 = scmp.eq.s32.totalorder %s20, 1
      %p248 = scmp.ne.s32.totalorder %s243, %s245
      %p249 = scmp.eq.s32.totalorder %s20, 0
      %p250 = por %p248, %p249
      %p251 = scmp.ne.s32.totalorder %s243, %s245
      %p252 = scmp.eq.s32.totalorder %s25, 1
      %p253 = por %p251, %p252
      %p254 = scmp.ne.s32.totalorder %s245, %s246
      %p255 = scmp.eq.s32.totalorder %s25, 0
      %p256 = por %p254, %p255
      %p257 = scmp.ne.s32.totalorder %s245, %s246
      %p258 = scmp.eq.s32.totalorder %s26, 1
      %p259 = por %p257, %p258
      %p261 = scmp.ne.s32.totalorder %s246, %s260
      %p262 = scmp.eq.s32.totalorder %s26, 0
      %p263 = por %p261, %p262
      %s264 = ssub.s32 %s20, %s27
      %p265 = scmp.eq.s32.totalorder %s264, 0
      %s267 = sadd.s32 %s266, 1
      %s268 = scalar_select %p265, %s266, %s267
      %p271 = pneg %p265
      %p272 = scmp.eq.s32.totalorder %s20, 1
      %p273 = por %p271, %p272
      %p274 = scmp.ne.s32.totalorder %s266, %s269
      %p275 = scmp.eq.s32.totalorder %s20, 0
      %p276 = por %p274, %p275
      %p277 = scmp.ne.s32.totalorder %s266, %s269
      %p278 = scmp.eq.s32.totalorder %s25, 1
      %p279 = por %p277, %p278
      %p280 = scmp.ne.s32.totalorder %s269, %s270
      %p281 = scmp.eq.s32.totalorder %s25, 0
      %p282 = por %p280, %p281
      %p283 = scmp.ne.s32.totalorder %s269, %s270
      %p284 = scmp.eq.s32.totalorder %s26, 1
      %p285 = por %p283, %p284
      %p287 = scmp.ne.s32.totalorder %s270, %s286
      %p288 = scmp.eq.s32.totalorder %s26, 0
      %p289 = por %p287, %p288
      %p290 = scmp.le.s32.totalorder 1, %s20
      %p291 = scmp.lt.s32.totalorder %s20, 3
      %p292 = pnand %p290, %p291
      %p293 = pneg %p292
      // Predicated region
      $region9: #{tpu_custom_call.1} parent=5 // pred_check
        _
      $region10: #{tpu_custom_call.1} parent=5 // pred_check_branch
        %295 = sbr.rel (%p292) target = $region12
      $region11: #{tpu_custom_call.1} parent=5 // pred_region
        %s296 = ssub.s32 %s20, 1
        // Predicated region
        $region13: #{tpu_custom_call.1} parent=11 // pred_check
          %p297 = pneg %p67
        $region14: #{tpu_custom_call.1} parent=11 // pred_check_branch
          %299 = sbr.rel (%p297) target = $region16
        $region15: #{tpu_custom_call.1} parent=11 // pred_region
          _
        $region16: #{tpu_custom_call.1} parent=11 // pred_fallthru
          _
        // Predicated region
        $region17: #{tpu_custom_call.1} parent=11 // pred_check
          %p300 = pneg %p88
        $region18: #{tpu_custom_call.1} parent=11 // pred_check_branch
          %302 = sbr.rel (%p300) target = $region20
        $region19: #{tpu_custom_call.1} parent=11 // pred_region
          _
        $region20: #{tpu_custom_call.1} parent=11 // pred_fallthru
          _
        // Predicated region
        $region21: #{tpu_custom_call.1} parent=11 // pred_check
          %p303 = pneg %p109
        $region22: #{tpu_custom_call.1} parent=11 // pred_check_branch
          %305 = sbr.rel (%p303) target = $region24
        $region23: #{tpu_custom_call.1} parent=11 // pred_region
          _
        $region24: #{tpu_custom_call.1} parent=11 // pred_fallthru
          _
        // Predicated region
        $region25: #{tpu_custom_call.1} parent=11 // pred_check
          %p306 = pneg %p130
        $region26: #{tpu_custom_call.1} parent=11 // pred_check_branch
          %308 = sbr.rel (%p306) target = $region28
        $region27: #{tpu_custom_call.1} parent=11 // pred_region
          _
        $region28: #{tpu_custom_call.1} parent=11 // pred_fallthru
          _
        // Predicated region
        $region29: #{tpu_custom_call.1} parent=11 // pred_check
          %p309 = pneg %p151
        $region30: #{tpu_custom_call.1} parent=11 // pred_check_branch
          %311 = sbr.rel (%p309) target = $region32
        $region31: #{tpu_custom_call.1} parent=11 // pred_region
          _
        $region32: #{tpu_custom_call.1} parent=11 // pred_fallthru
          _
        // Predicated region
        $region33: #{tpu_custom_call.1} parent=11 // pred_check
          %p312 = pneg %p172
        $region34: #{tpu_custom_call.1} parent=11 // pred_check_branch
          %314 = sbr.rel (%p312) target = $region36
        $region35: #{tpu_custom_call.1} parent=11 // pred_region
          _
        $region36: #{tpu_custom_call.1} parent=11 // pred_fallthru
          _
        // Predicated region
        $region37: #{tpu_custom_call.1} parent=11 // pred_check
          %p315 = pneg %p193
        $region38: #{tpu_custom_call.1} parent=11 // pred_check_branch
          %317 = sbr.rel (%p315) target = $region40
        $region39: #{tpu_custom_call.1} parent=11 // pred_region
          _
        $region40: #{tpu_custom_call.1} parent=11 // pred_fallthru
          _
        // Predicated region
        $region41: #{tpu_custom_call.1} parent=11 // pred_check
          %p318 = pneg %p214
        $region42: #{tpu_custom_call.1} parent=11 // pred_check_branch
          %320 = sbr.rel (%p318) target = $region44
        $region43: #{tpu_custom_call.1} parent=11 // pred_region
          _
        $region44: #{tpu_custom_call.1} parent=11 // pred_fallthru
          _
        // Predicated region
        $region45: #{tpu_custom_call.1} parent=11 // pred_check
          %p321 = pneg %p235
        $region46: #{tpu_custom_call.1} parent=11 // pred_check_branch
          %323 = sbr.rel (%p321) target = $region48
        $region47: #{tpu_custom_call.1} parent=11 // pred_region
          _
        $region48: #{tpu_custom_call.1} parent=11 // pred_fallthru
          _
        // Predicated region
        $region49: #{tpu_custom_call.1} parent=11 // pred_check
          %p324 = pneg %p256
        $region50: #{tpu_custom_call.1} parent=11 // pred_check_branch
          %326 = sbr.rel (%p324) target = $region52
        $region51: #{tpu_custom_call.1} parent=11 // pred_region
          _
        $region52: #{tpu_custom_call.1} parent=11 // pred_fallthru
          _
      $region12: #{tpu_custom_call.1} parent=5 // pred_fallthru
        _
      %p327 = scmp.lt.s32.totalorder %s20, 2
      // Predicated region
      $region53: #{tpu_custom_call.1} parent=5 // pred_check
        %p328 = pneg %p327
      $region54: #{tpu_custom_call.1} parent=5 // pred_check_branch
        %330 = sbr.rel (%p328) target = $region56
      $region55: #{tpu_custom_call.1} parent=5 // pred_region
        // Predicated region
        $region57: #{tpu_custom_call.1} parent=55 // pred_check
          %p331 = pneg %p40
        $region58: #{tpu_custom_call.1} parent=55 // pred_check_branch
          %333 = sbr.rel (%p331) target = $region60
        $region59: #{tpu_custom_call.1} parent=55 // pred_region
          %p334 = scmp.lt.s32.totalorder %s20, 1
          %s335 = scalar_select %p334, %s20, 1
          %s336 = smul.addr %s335, 2
          %s337 = smul.addr %s336, 8
          %s338 = scalar_lea.vmem %s0, %s337
        $region60: #{tpu_custom_call.1} parent=55 // pred_fallthru
          _
      $region56: #{tpu_custom_call.1} parent=5 // pred_fallthru
        _
      %p339 = scmp.le.s32.totalorder 1, %s20
      %p340 = scmp.lt.s32.totalorder %s20, 3
      %p341 = pnand %p339, %p340
      %p342 = pneg %p341
      // Predicated region
      $region61: #{tpu_custom_call.1} parent=5 // pred_check
        _
      $region62: #{tpu_custom_call.1} parent=5 // pred_check_branch
        %344 = sbr.rel (%p341) target = $region64
      $region63: #{tpu_custom_call.1} parent=5 // pred_region
        %s345 = ssub.s32 %s20, 1
        %p346 = scmp.lt.s32.totalorder %s25, 1
        %s347 = scalar_select %p346, %s25, 1
        %s348 = smul.addr %s347, 2
        %s349 = smul.addr %s348, 8
        %s350 = scalar_lea.vmem %s0, %s349
        %p351 = pneg %p46
        %p352 = pneg %p43
        %p353 = pneg %p67
        %p354 = pneg %p64
        %p355 = pneg %p88
        %p356 = pneg %p85
        %p357 = pneg %p109
        %p358 = pneg %p106
        %p359 = pneg %p130
        %p360 = pneg %p127
        %p361 = pneg %p151
        %p362 = pneg %p148
        %p363 = pneg %p172
        %p364 = pneg %p169
        %p365 = pneg %p193
        %p366 = pneg %p190
        %p367 = pneg %p214
        %p368 = pneg %p211
        %p369 = pneg %p235
        %p370 = pneg %p232
        %p371 = pneg %p256
        %p372 = pneg %p253
        %p373 = pneg %p282
        %p374 = pneg %p279
        %s375 = sand.u32 %s269, 1
        %s376 = scalar_lea.sflag [#allocation4], %s375
        %s377 = sand.u32 %s269, 1
        %s378 = smul.addr %s377, 16
        %s379 = scalar_lea.vmem [#allocation3], %s378
        %p380 = scmp.lt.s32.totalorder %s25, 1
        %s381 = scalar_select %p380, %s25, 1
        %s382 = smul.addr %s381, 2
        %s383 = smul.addr %s382, 8
        %s384 = scalar_lea.vmem %s0, %s383
        %386 = vst [vmem:[#allocation2] sm:$0xff] 0
        %vm387 = vcmask 273408
        %388 = vst.msk [vmem:[#allocation2 + $0x8] sm:$0xf] %vm387, 0
        %v389 = vld [vmem:[%s1] sm:$0x3]
        %v390 = vld [vmem:[%s2] sm:$0x3]
        %v391 = vld [vmem:[%s4] sm:$0xff]
        %v392 = vld [vmem:[%s6] sm:$0xff]
        %v393 = vld [vmem:[%s7] sm:$0xff]
        %v394 = vld [vmem:[%s8] sm:$0x1]
        %v395 = vld [vmem:[%s9] sm:$0xff]
        %v396 = vld [vmem:[%s9 + $0x8] sm:$0xff]
        %v397 = vld [vmem:[%s10] sm:$0xff]
        %v398 = vld [vmem:[%s10 + $0x8] sm:$0xff]
        %v399 = vld [vmem:[%s384] sm:$0xff]
        %v400 = vld [vmem:[%s384 + $0x8] sm:$0xff]
        %v401 = vpack.c.bf16 %v399, %v399
        %v402 = vpack.c.bf16 %v400, %v400
        %v405 = vunpack.c.l.b16 %v401
        %v406 = vunpack.c.l.b16 %v402
        %v407 = vpack.c.b16 %v406, %v405
        %408 = vrot.lane.b32.xlu0 %v407, 17
        %v409 = vpop.permute.xlu0 %408
        %v410 = vrot.slane %v409, 4
        %vm411 = vcmask 138240
        %v412 = vsel %vm411, %v410, %v409
        %vm415 = vcmask 1043592
        %vm416 = vcmask 1047556
        %vm417 = vmor %vm416, %vm415
        %418 = vst.msk [vmem:[#allocation2] sm:$0xff] %vm417, %v412
        %vm419 = vcmask 134144
        %420 = vst.msk [vmem:[#allocation2 + $0x8] sm:$0xf] %vm419, %v410
        %s421 = scalar_lea.vmem %s3, 4
        %v422 = vld [vmem:[%s421] sm:$0xf]
        %v423 = vld [vmem:[#allocation2] sm:$0xff]
        %v424 = vld [vmem:[#allocation2 + $0x8] sm:$0xf]
        %s425 = scalar_lea.vmem %s3, 16
        %v426 = vld [vmem:[%s425] sm:$0xf]
        %v429 = vunpack.c.l.b16 %v423
        %v430 = vunpack.c.h.b16 %v423
        %v431 = vunpack.c.l.b16 %v424
        %v432 = vpack.c.b16 %v429, %v429
        %v433 = vpack.c.b16 %v430, %v430
        %v434 = vpack.c.b16 %v431, %v431
        %435 = vrot.lane.b32.xlu0 %v432, 111
        %v436 = vpop.permute.xlu0 %435
        %437 = vrot.lane.b32.xlu0 %v433, 111
        %v438 = vpop.permute.xlu0 %437
        %439 = vrot.lane.b32.xlu0 %v434, 111
        %v440 = vpop.permute.xlu0 %439
        %vm441 = vcmask 908288
        %v442 = vsel %vm441, %v436, %v438
        %v443 = vsel %vm441, %v438, %v440
        %vm444 = vcmask 64512
        %v446 = vsel %vm444, %v426, 0
        %vm448 = vcmask 1043456
        %v450 = vsel %vm448, %v442, 0
        %v453 = vsel %vm448, %v443, 0
        %455 = vmatprep.subr.bf16.mxu0 %v453
        %456 = vmatpush1.bf16.msra.mxu0 %v450
        %457 = vmatprep.subr.bf16.mxu0 0
        %458 = vmatpush1.bf16.msra.mxu0 0
        %459 = vmatprep.subr.bf16.mxu0 0
        %460 = vmatpush1.bf16.msra.mxu0 0
        %461 = vmatprep.subr.bf16.mxu0 0
        %462 = vmatpush1.bf16.msra.mxu0 0
        %463 = vmatprep.subr.bf16.mxu0 0
        %464 = vmatpush1.bf16.msra.mxu0 0
        %465 = vmatprep.subr.bf16.mxu0 0
        %466 = vmatpush1.bf16.msra.mxu0 0
        %467 = vmatprep.subr.bf16.mxu0 0
        %468 = vmatpush1.bf16.msra.mxu0 0
        %469 = vmatprep.subr.bf16.mxu0 0
        %470 = vmatpush1.bf16.msra.mxu0 0
        %471 = vmatprep.subr.bf16.mxu0 0
        %472 = vmatpush1.bf16.msra.mxu0 0
        %473 = vmatprep.subr.bf16.mxu0 0
        %474 = vmatpush1.bf16.msra.mxu0 0
        %475 = vmatprep.subr.bf16.mxu0 0
        %476 = vmatpush1.bf16.msra.mxu0 0
        %477 = vmatprep.subr.bf16.mxu0 0
        %478 = vmatpush1.bf16.msra.mxu0 0
        %479 = vmatprep.subr.bf16.mxu0 0
        %480 = vmatpush1.bf16.msra.mxu0 0
        %481 = vmatprep.subr.bf16.mxu0 0
        %482 = vmatpush1.bf16.msra.mxu0 0
        %483 = vmatprep.subr.bf16.mxu0 0
        %484 = vmatpush1.bf16.msra.mxu0 0
        %485 = vmatprep.subr.bf16.mxu0 0
        %486 = vmatpush1.bf16.msra.mxu0 0
        %487 = vmatprep.mubr.bf16.mxu0 0
        %488 = vmatmul.mubr.bf16.gmra.mrb[0].mxu0 %v446
        %v489 = vpop.f32.mrb[0].mxu0
        %v490 = vadd.f32 0.0, %v489
        %v491 = vpop.f32.mrb[0].mxu0
        %v492 = vadd.f32 0.0, %v491
        %v493 = vpop.f32.mrb[0].mxu0
        %v494 = vpop.f32.mrb[0].mxu0
        %495 = vdwg.mxu0
        %496 = vrot.lane.b32.xlu0 %v432, 127
        %v497 = vpop.permute.xlu0 %496
        %498 = vrot.lane.b32.xlu0 %v433, 127
        %v499 = vpop.permute.xlu0 %498
        %500 = vrot.lane.b32.xlu0 %v434, 127
        %v501 = vpop.permute.xlu0 %500
        %vm502 = vcmask 1039360
        %v503 = vsel %vm502, %v497, %v499
        %v504 = vsel %vm502, %v499, %v501
        %v506 = vsel %vm444, %v422, 0
        %v509 = vsel %vm448, %v503, 0
        %v512 = vsel %vm448, %v504, 0
        %514 = vmatprep.subr.bf16.mxu0 %v512
        %515 = vmatpush1.bf16.msra.mxu0 %v509
        %516 = vmatprep.subr.bf16.mxu0 0
        %517 = vmatpush1.bf16.msra.mxu0 0
        %518 = vmatprep.subr.bf16.mxu0 0
        %519 = vmatpush1.bf16.msra.mxu0 0
        %520 = vmatprep.subr.bf16.mxu0 0
        %521 = vmatpush1.bf16.msra.mxu0 0
        %522 = vmatprep.subr.bf16.mxu0 0
        %523 = vmatpush1.bf16.msra.mxu0 0
        %524 = vmatprep.subr.bf16.mxu0 0
        %525 = vmatpush1.bf16.msra.mxu0 0
        %526 = vmatprep.subr.bf16.mxu0 0
        %527 = vmatpush1.bf16.msra.mxu0 0
        %528 = vmatprep.subr.bf16.mxu0 0
        %529 = vmatpush1.bf16.msra.mxu0 0
        %530 = vmatprep.subr.bf16.mxu0 0
        %531 = vmatpush1.bf16.msra.mxu0 0
        %532 = vmatprep.subr.bf16.mxu0 0
        %533 = vmatpush1.bf16.msra.mxu0 0
        %534 = vmatprep.subr.bf16.mxu0 0
        %535 = vmatpush1.bf16.msra.mxu0 0
        %536 = vmatprep.subr.bf16.mxu0 0
        %537 = vmatpush1.bf16.msra.mxu0 0
        %538 = vmatprep.subr.bf16.mxu0 0
        %539 = vmatpush1.bf16.msra.mxu0 0
        %540 = vmatprep.subr.bf16.mxu0 0
        %541 = vmatpush1.bf16.msra.mxu0 0
        %542 = vmatprep.subr.bf16.mxu0 0
        %543 = vmatpush1.bf16.msra.mxu0 0
        %544 = vmatprep.subr.bf16.mxu0 0
        %545 = vmatpush1.bf16.msra.mxu0 0
        %546 = vmatprep.mubr.bf16.mxu0 0
        %547 = vmatmul.mubr.bf16.gmra.mrb[0].mxu0 %v506
        %v548 = vpop.f32.mrb[0].mxu0
        %v549 = vadd.f32 %v490, %v548
        %v550 = vpop.f32.mrb[0].mxu0
        %v551 = vadd.f32 %v492, %v550
        %v552 = vpop.f32.mrb[0].mxu0
        %v553 = vpop.f32.mrb[0].mxu0
        %554 = vdwg.mxu0
        %s555 = scalar_lea.vmem %s3, 28
        %v556 = vld [vmem:[%s555] sm:$0xf]
        %557 = vrot.lane.b32.xlu0 %v432, 95
        %v558 = vpop.permute.xlu0 %557
        %559 = vrot.lane.b32.xlu0 %v433, 95
        %v560 = vpop.permute.xlu0 %559
        %561 = vrot.lane.b32.xlu0 %v434, 95
        %v562 = vpop.permute.xlu0 %561
        %vm563 = vcmask 777216
        %v564 = vsel %vm563, %v558, %v560
        %v565 = vsel %vm563, %v560, %v562
        %v567 = vsel %vm444, %v556, 0
        %v570 = vsel %vm448, %v564, 0
        %v573 = vsel %vm448, %v565, 0
        %575 = vmatprep.subr.bf16.mxu0 %v573
        %576 = vmatpush1.bf16.msra.mxu0 %v570
        %577 = vmatprep.subr.bf16.mxu0 0
        %578 = vmatpush1.bf16.msra.mxu0 0
        %579 = vmatprep.subr.bf16.mxu0 0
        %580 = vmatpush1.bf16.msra.mxu0 0
        %581 = vmatprep.subr.bf16.mxu0 0
        %582 = vmatpush1.bf16.msra.mxu0 0
        %583 = vmatprep.subr.bf16.mxu0 0
        %584 = vmatpush1.bf16.msra.mxu0 0
        %585 = vmatprep.subr.bf16.mxu0 0
        %586 = vmatpush1.bf16.msra.mxu0 0
        %587 = vmatprep.subr.bf16.mxu0 0
        %588 = vmatpush1.bf16.msra.mxu0 0
        %589 = vmatprep.subr.bf16.mxu0 0
        %590 = vmatpush1.bf16.msra.mxu0 0
        %591 = vmatprep.subr.bf16.mxu0 0
        %592 = vmatpush1.bf16.msra.mxu0 0
        %593 = vmatprep.subr.bf16.mxu0 0
        %594 = vmatpush1.bf16.msra.mxu0 0
        %595 = vmatprep.subr.bf16.mxu0 0
        %596 = vmatpush1.bf16.msra.mxu0 0
        %597 = vmatprep.subr.bf16.mxu0 0
        %598 = vmatpush1.bf16.msra.mxu0 0
        %599 = vmatprep.subr.bf16.mxu0 0
        %600 = vmatpush1.bf16.msra.mxu0 0
        %601 = vmatprep.subr.bf16.mxu0 0
        %602 = vmatpush1.bf16.msra.mxu0 0
        %603 = vmatprep.subr.bf16.mxu0 0
        %604 = vmatpush1.bf16.msra.mxu0 0
        %605 = vmatprep.subr.bf16.mxu0 0
        %606 = vmatpush1.bf16.msra.mxu0 0
        %607 = vmatprep.mubr.bf16.mxu0 0
        %608 = vmatmul.mubr.bf16.gmra.mrb[0].mxu0 %v567
        %v609 = vpop.f32.mrb[0].mxu0
        %v610 = vadd.f32 0.0, %v609
        %v611 = vpop.f32.mrb[0].mxu0
        %v612 = vadd.f32 0.0, %v611
        %v613 = vpop.f32.mrb[0].mxu0
        %v614 = vpop.f32.mrb[0].mxu0
        %615 = vdwg.mxu0
        %v616 = vadd.f32 %v549, %v610
        %v617 = vadd.f32 %v551, %v612
        %v618 = vld [vmem:[%s3] sm:$0xf]
        %v619 = vld [vmem:[#allocation2] sm:$0xff]
        %s620 = scalar_lea.vmem %s3, 12
        %v621 = vld [vmem:[%s620] sm:$0xf]
        %622 = vrot.lane.b32.xlu0 %v432, 112
        %v623 = vpop.permute.xlu0 %622
        %624 = vrot.lane.b32.xlu0 %v433, 112
        %v625 = vpop.permute.xlu0 %624
        %626 = vrot.lane.b32.xlu0 %v434, 112
        %v627 = vpop.permute.xlu0 %626
        %vm628 = vcmask 916480
        %v629 = vsel %vm628, %v623, %v625
        %v630 = vsel %vm628, %v625, %v627
        %v632 = vsel %vm444, %v621, 0
        %v635 = vsel %vm448, %v629, 0
        %v638 = vsel %vm448, %v630, 0
        %640 = vmatprep.subr.bf16.mxu0 %v638
        %641 = vmatpush1.bf16.msra.mxu0 %v635
        %642 = vmatprep.subr.bf16.mxu0 0
        %643 = vmatpush1.bf16.msra.mxu0 0
        %644 = vmatprep.subr.bf16.mxu0 0
        %645 = vmatpush1.bf16.msra.mxu0 0
        %646 = vmatprep.subr.bf16.mxu0 0
        %647 = vmatpush1.bf16.msra.mxu0 0
        %648 = vmatprep.subr.bf16.mxu0 0
        %649 = vmatpush1.bf16.msra.mxu0 0
        %650 = vmatprep.subr.bf16.mxu0 0
        %651 = vmatpush1.bf16.msra.mxu0 0
        %652 = vmatprep.subr.bf16.mxu0 0
        %653 = vmatpush1.bf16.msra.mxu0 0
        %654 = vmatprep.subr.bf16.mxu0 0
        %655 = vmatpush1.bf16.msra.mxu0 0
        %656 = vmatprep.subr.bf16.mxu0 0
        %657 = vmatpush1.bf16.msra.mxu0 0
        %658 = vmatprep.subr.bf16.mxu0 0
        %659 = vmatpush1.bf16.msra.mxu0 0
        %660 = vmatprep.subr.bf16.mxu0 0
        %661 = vmatpush1.bf16.msra.mxu0 0
        %662 = vmatprep.subr.bf16.mxu0 0
        %663 = vmatpush1.bf16.msra.mxu0 0
        %664 = vmatprep.subr.bf16.mxu0 0
        %665 = vmatpush1.bf16.msra.mxu0 0
        %666 = vmatprep.subr.bf16.mxu0 0
        %667 = vmatpush1.bf16.msra.mxu0 0
        %668 = vmatprep.subr.bf16.mxu0 0
        %669 = vmatpush1.bf16.msra.mxu0 0
        %670 = vmatprep.subr.bf16.mxu0 0
        %671 = vmatpush1.bf16.msra.mxu0 0
        %672 = vmatprep.mubr.bf16.mxu0 0
        %673 = vmatmul.mubr.bf16.gmra.mrb[0].mxu0 %v632
        %v674 = vpop.f32.mrb[0].mxu0
        %v675 = vadd.f32 0.0, %v674
        %v676 = vpop.f32.mrb[0].mxu0
        %v677 = vadd.f32 0.0, %v676
        %v678 = vpop.f32.mrb[0].mxu0
        %v679 = vpop.f32.mrb[0].mxu0
        %680 = vdwg.mxu0
        %v682 = vunpack.c.l.b16 %v619
        %v683 = vunpack.c.h.b16 %v619
        %v684 = vpack.c.b16 %v682, %v682
        %v685 = vpack.c.b16 %v683, %v683
        %v687 = vsel %vm444, %v618, 0
        %v690 = vsel %vm448, %v684, 0
        %v693 = vsel %vm448, %v685, 0
        %695 = vmatprep.subr.bf16.mxu0 %v693
        %696 = vmatpush1.bf16.msra.mxu0 %v690
        %697 = vmatprep.subr.bf16.mxu0 0
        %698 = vmatpush1.bf16.msra.mxu0 0
        %699 = vmatprep.subr.bf16.mxu0 0
        %700 = vmatpush1.bf16.msra.mxu0 0
        %701 = vmatprep.subr.bf16.mxu0 0
        %702 = vmatpush1.bf16.msra.mxu0 0
        %703 = vmatprep.subr.bf16.mxu0 0
        %704 = vmatpush1.bf16.msra.mxu0 0
        %705 = vmatprep.subr.bf16.mxu0 0
        %706 = vmatpush1.bf16.msra.mxu0 0
        %707 = vmatprep.subr.bf16.mxu0 0
        %708 = vmatpush1.bf16.msra.mxu0 0
        %709 = vmatprep.subr.bf16.mxu0 0
        %710 = vmatpush1.bf16.msra.mxu0 0
        %711 = vmatprep.subr.bf16.mxu0 0
        %712 = vmatpush1.bf16.msra.mxu0 0
        %713 = vmatprep.subr.bf16.mxu0 0
        %714 = vmatpush1.bf16.msra.mxu0 0
        %715 = vmatprep.subr.bf16.mxu0 0
        %716 = vmatpush1.bf16.msra.mxu0 0
        %717 = vmatprep.subr.bf16.mxu0 0
        %718 = vmatpush1.bf16.msra.mxu0 0
        %719 = vmatprep.subr.bf16.mxu0 0
        %720 = vmatpush1.bf16.msra.mxu0 0
        %721 = vmatprep.subr.bf16.mxu0 0
        %722 = vmatpush1.bf16.msra.mxu0 0
        %723 = vmatprep.subr.bf16.mxu0 0
        %724 = vmatpush1.bf16.msra.mxu0 0
        %725 = vmatprep.subr.bf16.mxu0 0
        %726 = vmatpush1.bf16.msra.mxu0 0
        %727 = vmatprep.mubr.bf16.mxu0 0
        %728 = vmatmul.mubr.bf16.gmra.mrb[0].mxu0 %v687
        %v729 = vpop.f32.mrb[0].mxu0
        %v730 = vadd.f32 %v675, %v729
        %v731 = vpop.f32.mrb[0].mxu0
        %v732 = vadd.f32 %v677, %v731
        %v733 = vpop.f32.mrb[0].mxu0
        %v734 = vpop.f32.mrb[0].mxu0
        %735 = vdwg.mxu0
        %s736 = scalar_lea.vmem %s3, 24
        %v737 = vld [vmem:[%s736] sm:$0xf]
        %738 = vrot.lane.b32.xlu0 %v432, 96
        %v739 = vpop.permute.xlu0 %738
        %740 = vrot.lane.b32.xlu0 %v433, 96
        %v741 = vpop.permute.xlu0 %740
        %742 = vrot.lane.b32.xlu0 %v434, 96
        %v743 = vpop.permute.xlu0 %742
        %vm744 = vcmask 785408
        %v745 = vsel %vm744, %v739, %v741
        %v746 = vsel %vm744, %v741, %v743
        %v748 = vsel %vm444, %v737, 0
        %v751 = vsel %vm448, %v745, 0
        %v754 = vsel %vm448, %v746, 0
        %756 = vmatprep.subr.bf16.mxu0 %v754
        %757 = vmatpush1.bf16.msra.mxu0 %v751
        %758 = vmatprep.subr.bf16.mxu0 0
        %759 = vmatpush1.bf16.msra.mxu0 0
        %760 = vmatprep.subr.bf16.mxu0 0
        %761 = vmatpush1.bf16.msra.mxu0 0
        %762 = vmatprep.subr.bf16.mxu0 0
        %763 = vmatpush1.bf16.msra.mxu0 0
        %764 = vmatprep.subr.bf16.mxu0 0
        %765 = vmatpush1.bf16.msra.mxu0 0
        %766 = vmatprep.subr.bf16.mxu0 0
        %767 = vmatpush1.bf16.msra.mxu0 0
        %768 = vmatprep.subr.bf16.mxu0 0
        %769 = vmatpush1.bf16.msra.mxu0 0
        %770 = vmatprep.subr.bf16.mxu0 0
        %771 = vmatpush1.bf16.msra.mxu0 0
        %772 = vmatprep.subr.bf16.mxu0 0
        %773 = vmatpush1.bf16.msra.mxu0 0
        %774 = vmatprep.subr.bf16.mxu0 0
        %775 = vmatpush1.bf16.msra.mxu0 0
        %776 = vmatprep.subr.bf16.mxu0 0
        %777 = vmatpush1.bf16.msra.mxu0 0
        %778 = vmatprep.subr.bf16.mxu0 0
        %779 = vmatpush1.bf16.msra.mxu0 0
        %780 = vmatprep.subr.bf16.mxu0 0
        %781 = vmatpush1.bf16.msra.mxu0 0
        %782 = vmatprep.subr.bf16.mxu0 0
        %783 = vmatpush1.bf16.msra.mxu0 0
        %784 = vmatprep.subr.bf16.mxu0 0
        %785 = vmatpush1.bf16.msra.mxu0 0
        %786 = vmatprep.subr.bf16.mxu0 0
        %787 = vmatpush1.bf16.msra.mxu0 0
        %788 = vmatprep.mubr.bf16.mxu0 0
        %789 = vmatmul.mubr.bf16.gmra.mrb[0].mxu0 %v748
        %v790 = vpop.f32.mrb[0].mxu0
        %v791 = vadd.f32 0.0, %v790
        %v792 = vpop.f32.mrb[0].mxu0
        %v793 = vadd.f32 0.0, %v792
        %v794 = vpop.f32.mrb[0].mxu0
        %v795 = vpop.f32.mrb[0].mxu0
        %796 = vdwg.mxu0
        %v797 = vadd.f32 %v730, %v791
        %v798 = vadd.f32 %v732, %v793
        %v800 = vlaneseq
        %v801 = vshrl.u32 %v800, 7
        %v802 = vsub.s32 0, %v801
        %v803 = vrot.slane %v389, %v802
        %v804 = vlaneseq
        %v805 = vshrl.u32 %v804, 7
        %v806 = vsub.s32 1, %v805
        %v807 = vrot.slane %v389, %v806
        %v810 = vmul.f32 %v803, %v797
        %v811 = vmul.f32 %v807, %v798
        %v812 = vadd.f32 %v616, %v810
        %v813 = vadd.f32 %v617, %v811
        %s814 = scalar_lea.vmem %s3, 8
        %v815 = vld [vmem:[%s814] sm:$0xf]
        %s816 = scalar_lea.vmem %s3, 20
        %v817 = vld [vmem:[%s816] sm:$0xf]
        %818 = vrot.lane.b32.xlu0 %v432, 110
        %v819 = vpop.permute.xlu0 %818
        %820 = vrot.lane.b32.xlu0 %v433, 110
        %v821 = vpop.permute.xlu0 %820
        %822 = vrot.lane.b32.xlu0 %v434, 110
        %v823 = vpop.permute.xlu0 %822
        %vm824 = vcmask 900096
        %v825 = vsel %vm824, %v819, %v821
        %v826 = vsel %vm824, %v821, %v823
        %v828 = vsel %vm444, %v817, 0
        %v831 = vsel %vm448, %v825, 0
        %v834 = vsel %vm448, %v826, 0
        %836 = vmatprep.subr.bf16.mxu0 %v834
        %837 = vmatpush1.bf16.msra.mxu0 %v831
        %838 = vmatprep.subr.bf16.mxu0 0
        %839 = vmatpush1.bf16.msra.mxu0 0
        %840 = vmatprep.subr.bf16.mxu0 0
        %841 = vmatpush1.bf16.msra.mxu0 0
        %842 = vmatprep.subr.bf16.mxu0 0
        %843 = vmatpush1.bf16.msra.mxu0 0
        %844 = vmatprep.subr.bf16.mxu0 0
        %845 = vmatpush1.bf16.msra.mxu0 0
        %846 = vmatprep.subr.bf16.mxu0 0
        %847 = vmatpush1.bf16.msra.mxu0 0
        %848 = vmatprep.subr.bf16.mxu0 0
        %849 = vmatpush1.bf16.msra.mxu0 0
        %850 = vmatprep.subr.bf16.mxu0 0
        %851 = vmatpush1.bf16.msra.mxu0 0
        %852 = vmatprep.subr.bf16.mxu0 0
        %853 = vmatpush1.bf16.msra.mxu0 0
        %854 = vmatprep.subr.bf16.mxu0 0
        %855 = vmatpush1.bf16.msra.mxu0 0
        %856 = vmatprep.subr.bf16.mxu0 0
        %857 = vmatpush1.bf16.msra.mxu0 0
        %858 = vmatprep.subr.bf16.mxu0 0
        %859 = vmatpush1.bf16.msra.mxu0 0
        %860 = vmatprep.subr.bf16.mxu0 0
        %861 = vmatpush1.bf16.msra.mxu0 0
        %862 = vmatprep.subr.bf16.mxu0 0
        %863 = vmatpush1.bf16.msra.mxu0 0
        %864 = vmatprep.subr.bf16.mxu0 0
        %865 = vmatpush1.bf16.msra.mxu0 0
        %866 = vmatprep.subr.bf16.mxu0 0
        %867 = vmatpush1.bf16.msra.mxu0 0
        %868 = vmatprep.mubr.bf16.mxu0 0
        %869 = vmatmul.mubr.bf16.gmra.mrb[0].mxu0 %v828
        %v870 = vpop.f32.mrb[0].mxu0
        %v871 = vadd.f32 0.0, %v870
        %v872 = vpop.f32.mrb[0].mxu0
        %v873 = vadd.f32 0.0, %v872
        %v874 = vpop.f32.mrb[0].mxu0
        %v875 = vpop.f32.mrb[0].mxu0
        %876 = vdwg.mxu0
        %877 = vrot.lane.b32.xlu0 %v432, 126
        %v878 = vpop.permute.xlu0 %877
        %879 = vrot.lane.b32.xlu0 %v433, 126
        %v880 = vpop.permute.xlu0 %879
        %881 = vrot.lane.b32.xlu0 %v434, 126
        %v882 = vpop.permute.xlu0 %881
        %vm883 = vcmask 1031168
        %v884 = vsel %vm883, %v878, %v880
        %v885 = vsel %vm883, %v880, %v882
        %v887 = vsel %vm444, %v815, 0
        %v890 = vsel %vm448, %v884, 0
        %v893 = vsel %vm448, %v885, 0
        %895 = vmatprep.subr.bf16.mxu0 %v893
        %896 = vmatpush1.bf16.msra.mxu0 %v890
        %897 = vmatprep.subr.bf16.mxu0 0
        %898 = vmatpush1.bf16.msra.mxu0 0
        %899 = vmatprep.subr.bf16.mxu0 0
        %900 = vmatpush1.bf16.msra.mxu0 0
        %901 = vmatprep.subr.bf16.mxu0 0
        %902 = vmatpush1.bf16.msra.mxu0 0
        %903 = vmatprep.subr.bf16.mxu0 0
        %904 = vmatpush1.bf16.msra.mxu0 0
        %905 = vmatprep.subr.bf16.mxu0 0
        %906 = vmatpush1.bf16.msra.mxu0 0
        %907 = vmatprep.subr.bf16.mxu0 0
        %908 = vmatpush1.bf16.msra.mxu0 0
        %909 = vmatprep.subr.bf16.mxu0 0
        %910 = vmatpush1.bf16.msra.mxu0 0
        %911 = vmatprep.subr.bf16.mxu0 0
        %912 = vmatpush1.bf16.msra.mxu0 0
        %913 = vmatprep.subr.bf16.mxu0 0
        %914 = vmatpush1.bf16.msra.mxu0 0
        %915 = vmatprep.subr.bf16.mxu0 0
        %916 = vmatpush1.bf16.msra.mxu0 0
        %917 = vmatprep.subr.bf16.mxu0 0
        %918 = vmatpush1.bf16.msra.mxu0 0
        %919 = vmatprep.subr.bf16.mxu0 0
        %920 = vmatpush1.bf16.msra.mxu0 0
        %921 = vmatprep.subr.bf16.mxu0 0
        %922 = vmatpush1.bf16.msra.mxu0 0
        %923 = vmatprep.subr.bf16.mxu0 0
        %924 = vmatpush1.bf16.msra.mxu0 0
        %925 = vmatprep.subr.bf16.mxu0 0
        %926 = vmatpush1.bf16.msra.mxu0 0
        %927 = vmatprep.mubr.bf16.mxu0 0
        %928 = vmatmul.mubr.bf16.gmra.mrb[0].mxu0 %v887
        %v929 = vpop.f32.mrb[0].mxu0
        %v930 = vadd.f32 %v871, %v929
        %v931 = vpop.f32.mrb[0].mxu0
        %v932 = vadd.f32 %v873, %v931
        %v933 = vpop.f32.mrb[0].mxu0
        %v934 = vpop.f32.mrb[0].mxu0
        %935 = vdwg.mxu0
        %s936 = scalar_lea.vmem %s3, 32
        %v937 = vld [vmem:[%s936] sm:$0xf]
        %938 = vrot.lane.b32.xlu0 %v432, 94
        %v939 = vpop.permute.xlu0 %938
        %940 = vrot.lane.b32.xlu0 %v433, 94
        %v941 = vpop.permute.xlu0 %940
        %942 = vrot.lane.b32.xlu0 %v434, 94
        %v943 = vpop.permute.xlu0 %942
        %vm944 = vcmask 769024
        %v945 = vsel %vm944, %v939, %v941
        %v946 = vsel %vm944, %v941, %v943
        %v948 = vsel %vm444, %v937, 0
        %v951 = vsel %vm448, %v945, 0
        %v954 = vsel %vm448, %v946, 0
        %956 = vmatprep.subr.bf16.mxu0 %v954
        %957 = vmatpush1.bf16.msra.mxu0 %v951
        %958 = vmatprep.subr.bf16.mxu0 0
        %959 = vmatpush1.bf16.msra.mxu0 0
        %960 = vmatprep.subr.bf16.mxu0 0
        %961 = vmatpush1.bf16.msra.mxu0 0
        %962 = vmatprep.subr.bf16.mxu0 0
        %963 = vmatpush1.bf16.msra.mxu0 0
        %964 = vmatprep.subr.bf16.mxu0 0
        %965 = vmatpush1.bf16.msra.mxu0 0
        %966 = vmatprep.subr.bf16.mxu0 0
        %967 = vmatpush1.bf16.msra.mxu0 0
        %968 = vmatprep.subr.bf16.mxu0 0
        %969 = vmatpush1.bf16.msra.mxu0 0
        %970 = vmatprep.subr.bf16.mxu0 0
        %971 = vmatpush1.bf16.msra.mxu0 0
        %972 = vmatprep.subr.bf16.mxu0 0
        %973 = vmatpush1.bf16.msra.mxu0 0
        %974 = vmatprep.subr.bf16.mxu0 0
        %975 = vmatpush1.bf16.msra.mxu0 0
        %976 = vmatprep.subr.bf16.mxu0 0
        %977 = vmatpush1.bf16.msra.mxu0 0
        %978 = vmatprep.subr.bf16.mxu0 0
        %979 = vmatpush1.bf16.msra.mxu0 0
        %980 = vmatprep.subr.bf16.mxu0 0
        %981 = vmatpush1.bf16.msra.mxu0 0
        %982 = vmatprep.subr.bf16.mxu0 0
        %983 = vmatpush1.bf16.msra.mxu0 0
        %984 = vmatprep.subr.bf16.mxu0 0
        %985 = vmatpush1.bf16.msra.mxu0 0
        %986 = vmatprep.subr.bf16.mxu0 0
        %987 = vmatpush1.bf16.msra.mxu0 0
        %988 = vmatprep.mubr.bf16.mxu0 0
        %989 = vmatmul.mubr.bf16.gmra.mrb[0].mxu0 %v948
        %v990 = vpop.f32.mrb[0].mxu0
        %v991 = vadd.f32 0.0, %v990
        %v992 = vpop.f32.mrb[0].mxu0
        %v993 = vadd.f32 0.0, %v992
        %v994 = vpop.f32.mrb[0].mxu0
        %v995 = vpop.f32.mrb[0].mxu0
        %996 = vdwg.mxu0
        %v997 = vadd.f32 %v930, %v991
        %v998 = vadd.f32 %v932, %v993
        %v1000 = vlaneseq
        %v1001 = vshrl.u32 %v1000, 7
        %v1002 = vsub.s32 0, %v1001
        %v1003 = vrot.slane %v390, %v1002
        %v1004 = vlaneseq
        %v1005 = vshrl.u32 %v1004, 7
        %v1006 = vsub.s32 1, %v1005
        %v1007 = vrot.slane %v390, %v1006
        %v1010 = vmul.f32 %v1003, %v997
        %v1011 = vmul.f32 %v1007, %v998
        %v1012 = vadd.f32 %v812, %v1010
        %v1013 = vadd.f32 %v813, %v1011
        %1015 = vset.pattern.permute.xlu0 0
        %1016 = vperm.xlu0 %1015, %v391
        %v1017 = vpop.permute.xlu0 %1016
        %v1019 = vadd.f32 %v1012, %v1017
        %v1020 = vadd.f32 %v1013, %v1017
        %v1021 = vpack.c.bf16 %v1019, %v1019
        %v1022 = vpack.c.bf16 %v1020, %v1020
        %v1025 = vunpack.c.l.b16 %v1021
        %v1026 = vunpack.c.l.b16 %v1022
        %v1027 = vpack.c.b16 %v1026, %v1025
        %1028 = vrot.lane.b32.xlu0 %v1027, 17
        %v1029 = vpop.permute.xlu0 %1028
        %v1030 = vrot.slane %v1029, 4
        %v1031 = vsel %vm411, %v1030, %v1029
        %1034 = vst.msk [vmem:[#allocation2] sm:$0xff] %vm417, %v1031
        %1035 = vst.msk [vmem:[#allocation2 + $0x8] sm:$0xf] %vm419, %v1030
        %s1036 = scalar_lea.vmem %s5, 4
        %v1037 = vld [vmem:[%s1036] sm:$0xf]
        %v1038 = vld [vmem:[#allocation2] sm:$0xff]
        %v1039 = vld [vmem:[#allocation2 + $0x8] sm:$0xf]
        %s1040 = scalar_lea.vmem %s5, 16
        %v1041 = vld [vmem:[%s1040] sm:$0xf]
        %v1044 = vunpack.c.l.b16 %v1038
        %v1045 = vunpack.c.h.b16 %v1038
        %v1046 = vunpack.c.l.b16 %v1039
        %v1047 = vpack.c.b16 %v1044, %v1044
        %v1048 = vpack.c.b16 %v1045, %v1045
        %v1049 = vpack.c.b16 %v1046, %v1046
        %1050 = vrot.lane.b32.xlu0 %v1047, 111
        %v1051 = vpop.permute.xlu0 %1050
        %1052 = vrot.lane.b32.xlu0 %v1048, 111
        %v1053 = vpop.permute.xlu0 %1052
        %1054 = vrot.lane.b32.xlu0 %v1049, 111
        %v1055 = vpop.permute.xlu0 %1054
        %v1056 = vsel %vm441, %v1051, %v1053
        %v1057 = vsel %vm441, %v1053, %v1055
        %v1059 = vsel %vm444, %v1041, 0
        %v1062 = vsel %vm448, %v1056, 0
        %v1065 = vsel %vm448, %v1057, 0
        %1067 = vmatprep.subr.bf16.mxu0 %v1065
        %1068 = vmatpush1.bf16.msra.mxu0 %v1062
        %1069 = vmatprep.subr.bf16.mxu0 0
        %1070 = vmatpush1.bf16.msra.mxu0 0
        %1071 = vmatprep.subr.bf16.mxu0 0
        %1072 = vmatpush1.bf16.msra.mxu0 0
        %1073 = vmatprep.subr.bf16.mxu0 0
        %1074 = vmatpush1.bf16.msra.mxu0 0
        %1075 = vmatprep.subr.bf16.mxu0 0
        %1076 = vmatpush1.bf16.msra.mxu0 0
        %1077 = vmatprep.subr.bf16.mxu0 0
        %1078 = vmatpush1.bf16.msra.mxu0 0
        %1079 = vmatprep.subr.bf16.mxu0 0
        %1080 = vmatpush1.bf16.msra.mxu0 0
        %1081 = vmatprep.subr.bf16.mxu0 0
        %1082 = vmatpush1.bf16.msra.mxu0 0
        %1083 = vmatprep.subr.bf16.mxu0 0
        %1084 = vmatpush1.bf16.msra.mxu0 0
        %1085 = vmatprep.subr.bf16.mxu0 0
        %1086 = vmatpush1.bf16.msra.mxu0 0
        %1087 = vmatprep.subr.bf16.mxu0 0
        %1088 = vmatpush1.bf16.msra.mxu0 0
        %1089 = vmatprep.subr.bf16.mxu0 0
        %1090 = vmatpush1.bf16.msra.mxu0 0
        %1091 = vmatprep.subr.bf16.mxu0 0
        %1092 = vmatpush1.bf16.msra.mxu0 0
        %1093 = vmatprep.subr.bf16.mxu0 0
        %1094 = vmatpush1.bf16.msra.mxu0 0
        %1095 = vmatprep.subr.bf16.mxu0 0
        %1096 = vmatpush1.bf16.msra.mxu0 0
        %1097 = vmatprep.subr.bf16.mxu0 0
        %1098 = vmatpush1.bf16.msra.mxu0 0
        %1099 = vmatprep.mubr.bf16.mxu0 0
        %1100 = vmatmul.mubr.bf16.gmra.mrb[0].mxu0 %v1059
        %v1101 = vpop.f32.mrb[0].mxu0
        %v1102 = vadd.f32 0.0, %v1101
        %v1103 = vpop.f32.mrb[0].mxu0
        %v1104 = vadd.f32 0.0, %v1103
        %v1105 = vpop.f32.mrb[0].mxu0
        %v1106 = vpop.f32.mrb[0].mxu0
        %1107 = vdwg.mxu0
        %1108 = vrot.lane.b32.xlu0 %v1047, 127
        %v1109 = vpop.permute.xlu0 %1108
        %1110 = vrot.lane.b32.xlu0 %v1048, 127
        %v1111 = vpop.permute.xlu0 %1110
        %1112 = vrot.lane.b32.xlu0 %v1049, 127
        %v1113 = vpop.permute.xlu0 %1112
        %v1114 = vsel %vm502, %v1109, %v1111
        %v1115 = vsel %vm502, %v1111, %v1113
        %v1117 = vsel %vm444, %v1037, 0
        %v1120 = vsel %vm448, %v1114, 0
        %v1123 = vsel %vm448, %v1115, 0
        %1125 = vmatprep.subr.bf16.mxu0 %v1123
        %1126 = vmatpush1.bf16.msra.mxu0 %v1120
        %1127 = vmatprep.subr.bf16.mxu0 0
        %1128 = vmatpush1.bf16.msra.mxu0 0
        %1129 = vmatprep.subr.bf16.mxu0 0
        %1130 = vmatpush1.bf16.msra.mxu0 0
        %1131 = vmatprep.subr.bf16.mxu0 0
        %1132 = vmatpush1.bf16.msra.mxu0 0
        %1133 = vmatprep.subr.bf16.mxu0 0
        %1134 = vmatpush1.bf16.msra.mxu0 0
        %1135 = vmatprep.subr.bf16.mxu0 0
        %1136 = vmatpush1.bf16.msra.mxu0 0
        %1137 = vmatprep.subr.bf16.mxu0 0
        %1138 = vmatpush1.bf16.msra.mxu0 0
        %1139 = vmatprep.subr.bf16.mxu0 0
        %1140 = vmatpush1.bf16.msra.mxu0 0
        %1141 = vmatprep.subr.bf16.mxu0 0
        %1142 = vmatpush1.bf16.msra.mxu0 0
        %1143 = vmatprep.subr.bf16.mxu0 0
        %1144 = vmatpush1.bf16.msra.mxu0 0
        %1145 = vmatprep.subr.bf16.mxu0 0
        %1146 = vmatpush1.bf16.msra.mxu0 0
        %1147 = vmatprep.subr.bf16.mxu0 0
        %1148 = vmatpush1.bf16.msra.mxu0 0
        %1149 = vmatprep.subr.bf16.mxu0 0
        %1150 = vmatpush1.bf16.msra.mxu0 0
        %1151 = vmatprep.subr.bf16.mxu0 0
        %1152 = vmatpush1.bf16.msra.mxu0 0
        %1153 = vmatprep.subr.bf16.mxu0 0
        %1154 = vmatpush1.bf16.msra.mxu0 0
        %1155 = vmatprep.subr.bf16.mxu0 0
        %1156 = vmatpush1.bf16.msra.mxu0 0
        %1157 = vmatprep.mubr.bf16.mxu0 0
        %1158 = vmatmul.mubr.bf16.gmra.mrb[0].mxu0 %v1117
        %v1159 = vpop.f32.mrb[0].mxu0
        %v1160 = vadd.f32 %v1102, %v1159
        %v1161 = vpop.f32.mrb[0].mxu0
        %v1162 = vadd.f32 %v1104, %v1161
        %v1163 = vpop.f32.mrb[0].mxu0
        %v1164 = vpop.f32.mrb[0].mxu0
        %1165 = vdwg.mxu0
        %s1166 = scalar_lea.vmem %s5, 28
        %v1167 = vld [vmem:[%s1166] sm:$0xf]
        %1168 = vrot.lane.b32.xlu0 %v1047, 95
        %v1169 = vpop.permute.xlu0 %1168
        %1170 = vrot.lane.b32.xlu0 %v1048, 95
        %v1171 = vpop.permute.xlu0 %1170
        %1172 = vrot.lane.b32.xlu0 %v1049, 95
        %v1173 = vpop.permute.xlu0 %1172
        %v1174 = vsel %vm563, %v1169, %v1171
        %v1175 = vsel %vm563, %v1171, %v1173
        %v1177 = vsel %vm444, %v1167, 0
        %v1180 = vsel %vm448, %v1174, 0
        %v1183 = vsel %vm448, %v1175, 0
        %1185 = vmatprep.subr.bf16.mxu0 %v1183
        %1186 = vmatpush1.bf16.msra.mxu0 %v1180
        %1187 = vmatprep.subr.bf16.mxu0 0
        %1188 = vmatpush1.bf16.msra.mxu0 0
        %1189 = vmatprep.subr.bf16.mxu0 0
        %1190 = vmatpush1.bf16.msra.mxu0 0
        %1191 = vmatprep.subr.bf16.mxu0 0
        %1192 = vmatpush1.bf16.msra.mxu0 0
        %1193 = vmatprep.subr.bf16.mxu0 0
        %1194 = vmatpush1.bf16.msra.mxu0 0
        %1195 = vmatprep.subr.bf16.mxu0 0
        %1196 = vmatpush1.bf16.msra.mxu0 0
        %1197 = vmatprep.subr.bf16.mxu0 0
        %1198 = vmatpush1.bf16.msra.mxu0 0
        %1199 = vmatprep.subr.bf16.mxu0 0
        %1200 = vmatpush1.bf16.msra.mxu0 0
        %1201 = vmatprep.subr.bf16.mxu0 0
        %1202 = vmatpush1.bf16.msra.mxu0 0
        %1203 = vmatprep.subr.bf16.mxu0 0
        %1204 = vmatpush1.bf16.msra.mxu0 0
        %1205 = vmatprep.subr.bf16.mxu0 0
        %1206 = vmatpush1.bf16.msra.mxu0 0
        %1207 = vmatprep.subr.bf16.mxu0 0
        %1208 = vmatpush1.bf16.msra.mxu0 0
        %1209 = vmatprep.subr.bf16.mxu0 0
        %1210 = vmatpush1.bf16.msra.mxu0 0
        %1211 = vmatprep.subr.bf16.mxu0 0
        %1212 = vmatpush1.bf16.msra.mxu0 0
        %1213 = vmatprep.subr.bf16.mxu0 0
        %1214 = vmatpush1.bf16.msra.mxu0 0
        %1215 = vmatprep.subr.bf16.mxu0 0
        %1216 = vmatpush1.bf16.msra.mxu0 0
        %1217 = vmatprep.mubr.bf16.mxu0 0
        %1218 = vmatmul.mubr.bf16.gmra.mrb[0].mxu0 %v1177
        %v1219 = vpop.f32.mrb[0].mxu0
        %v1220 = vadd.f32 0.0, %v1219
        %v1221 = vpop.f32.mrb[0].mxu0
        %v1222 = vadd.f32 0.0, %v1221
        %v1223 = vpop.f32.mrb[0].mxu0
        %v1224 = vpop.f32.mrb[0].mxu0
        %1225 = vdwg.mxu0
        %v1226 = vadd.f32 %v1160, %v1220
        %v1227 = vadd.f32 %v1162, %v1222
        %v1228 = vld [vmem:[%s5] sm:$0xf]
        %v1229 = vld [vmem:[#allocation2] sm:$0xff]
        %s1230 = scalar_lea.vmem %s5, 12
        %v1231 = vld [vmem:[%s1230] sm:$0xf]
        %1232 = vrot.lane.b32.xlu0 %v1047, 112
        %v1233 = vpop.permute.xlu0 %1232
        %1234 = vrot.lane.b32.xlu0 %v1048, 112
        %v1235 = vpop.permute.xlu0 %1234
        %1236 = vrot.lane.b32.xlu0 %v1049, 112
        %v1237 = vpop.permute.xlu0 %1236
        %v1238 = vsel %vm628, %v1233, %v1235
        %v1239 = vsel %vm628, %v1235, %v1237
        %v1241 = vsel %vm444, %v1231, 0
        %v1244 = vsel %vm448, %v1238, 0
        %v1247 = vsel %vm448, %v1239, 0
        %1249 = vmatprep.subr.bf16.mxu0 %v1247
        %1250 = vmatpush1.bf16.msra.mxu0 %v1244
        %1251 = vmatprep.subr.bf16.mxu0 0
        %1252 = vmatpush1.bf16.msra.mxu0 0
        %1253 = vmatprep.subr.bf16.mxu0 0
        %1254 = vmatpush1.bf16.msra.mxu0 0
        %1255 = vmatprep.subr.bf16.mxu0 0
        %1256 = vmatpush1.bf16.msra.mxu0 0
        %1257 = vmatprep.subr.bf16.mxu0 0
        %1258 = vmatpush1.bf16.msra.mxu0 0
        %1259 = vmatprep.subr.bf16.mxu0 0
        %1260 = vmatpush1.bf16.msra.mxu0 0
        %1261 = vmatprep.subr.bf16.mxu0 0
        %1262 = vmatpush1.bf16.msra.mxu0 0
        %1263 = vmatprep.subr.bf16.mxu0 0
        %1264 = vmatpush1.bf16.msra.mxu0 0
        %1265 = vmatprep.subr.bf16.mxu0 0
        %1266 = vmatpush1.bf16.msra.mxu0 0
        %1267 = vmatprep.subr.bf16.mxu0 0
        %1268 = vmatpush1.bf16.msra.mxu0 0
        %1269 = vmatprep.subr.bf16.mxu0 0
        %1270 = vmatpush1.bf16.msra.mxu0 0
        %1271 = vmatprep.subr.bf16.mxu0 0
        %1272 = vmatpush1.bf16.msra.mxu0 0
        %1273 = vmatprep.subr.bf16.mxu0 0
        %1274 = vmatpush1.bf16.msra.mxu0 0
        %1275 = vmatprep.subr.bf16.mxu0 0
        %1276 = vmatpush1.bf16.msra.mxu0 0
        %1277 = vmatprep.subr.bf16.mxu0 0
        %1278 = vmatpush1.bf16.msra.mxu0 0
        %1279 = vmatprep.subr.bf16.mxu0 0
        %1280 = vmatpush1.bf16.msra.mxu0 0
        %1281 = vmatprep.mubr.bf16.mxu0 0
        %1282 = vmatmul.mubr.bf16.gmra.mrb[0].mxu0 %v1241
        %v1283 = vpop.f32.mrb[0].mxu0
        %v1284 = vadd.f32 0.0, %v1283
        %v1285 = vpop.f32.mrb[0].mxu0
        %v1286 = vadd.f32 0.0, %v1285
        %v1287 = vpop.f32.mrb[0].mxu0
        %v1288 = vpop.f32.mrb[0].mxu0
        %1289 = vdwg.mxu0
        %v1291 = vunpack.c.l.b16 %v1229
        %v1292 = vunpack.c.h.b16 %v1229
        %v1293 = vpack.c.b16 %v1291, %v1291
        %v1294 = vpack.c.b16 %v1292, %v1292
        %v1296 = vsel %vm444, %v1228, 0
        %v1299 = vsel %vm448, %v1293, 0
        %v1302 = vsel %vm448, %v1294, 0
        %1304 = vmatprep.subr.bf16.mxu0 %v1302
        %1305 = vmatpush1.bf16.msra.mxu0 %v1299
        %1306 = vmatprep.subr.bf16.mxu0 0
        %1307 = vmatpush1.bf16.msra.mxu0 0
        %1308 = vmatprep.subr.bf16.mxu0 0
        %1309 = vmatpush1.bf16.msra.mxu0 0
        %1310 = vmatprep.subr.bf16.mxu0 0
        %1311 = vmatpush1.bf16.msra.mxu0 0
        %1312 = vmatprep.subr.bf16.mxu0 0
        %1313 = vmatpush1.bf16.msra.mxu0 0
        %1314 = vmatprep.subr.bf16.mxu0 0
        %1315 = vmatpush1.bf16.msra.mxu0 0
        %1316 = vmatprep.subr.bf16.mxu0 0
        %1317 = vmatpush1.bf16.msra.mxu0 0
        %1318 = vmatprep.subr.bf16.mxu0 0
        %1319 = vmatpush1.bf16.msra.mxu0 0
        %1320 = vmatprep.subr.bf16.mxu0 0
        %1321 = vmatpush1.bf16.msra.mxu0 0
        %1322 = vmatprep.subr.bf16.mxu0 0
        %1323 = vmatpush1.bf16.msra.mxu0 0
        %1324 = vmatprep.subr.bf16.mxu0 0
        %1325 = vmatpush1.bf16.msra.mxu0 0
        %1326 = vmatprep.subr.bf16.mxu0 0
        %1327 = vmatpush1.bf16.msra.mxu0 0
        %1328 = vmatprep.subr.bf16.mxu0 0
        %1329 = vmatpush1.bf16.msra.mxu0 0
        %1330 = vmatprep.subr.bf16.mxu0 0
        %1331 = vmatpush1.bf16.msra.mxu0 0
        %1332 = vmatprep.subr.bf16.mxu0 0
        %1333 = vmatpush1.bf16.msra.mxu0 0
        %1334 = vmatprep.subr.bf16.mxu0 0
        %1335 = vmatpush1.bf16.msra.mxu0 0
        %1336 = vmatprep.mubr.bf16.mxu0 0
        %1337 = vmatmul.mubr.bf16.gmra.mrb[0].mxu0 %v1296
        %v1338 = vpop.f32.mrb[0].mxu0
        %v1339 = vadd.f32 %v1284, %v1338
        %v1340 = vpop.f32.mrb[0].mxu0
        %v1341 = vadd.f32 %v1286, %v1340
        %v1342 = vpop.f32.mrb[0].mxu0
        %v1343 = vpop.f32.mrb[0].mxu0
        %1344 = vdwg.mxu0
        %s1345 = scalar_lea.vmem %s5, 24
        %v1346 = vld [vmem:[%s1345] sm:$0xf]
        %1347 = vrot.lane.b32.xlu0 %v1047, 96
        %v1348 = vpop.permute.xlu0 %1347
        %1349 = vrot.lane.b32.xlu0 %v1048, 96
        %v1350 = vpop.permute.xlu0 %1349
        %1351 = vrot.lane.b32.xlu0 %v1049, 96
        %v1352 = vpop.permute.xlu0 %1351
        %v1353 = vsel %vm744, %v1348, %v1350
        %v1354 = vsel %vm744, %v1350, %v1352
        %v1356 = vsel %vm444, %v1346, 0
        %v1359 = vsel %vm448, %v1353, 0
        %v1362 = vsel %vm448, %v1354, 0
        %1364 = vmatprep.subr.bf16.mxu0 %v1362
        %1365 = vmatpush1.bf16.msra.mxu0 %v1359
        %1366 = vmatprep.subr.bf16.mxu0 0
        %1367 = vmatpush1.bf16.msra.mxu0 0
        %1368 = vmatprep.subr.bf16.mxu0 0
        %1369 = vmatpush1.bf16.msra.mxu0 0
        %1370 = vmatprep.subr.bf16.mxu0 0
        %1371 = vmatpush1.bf16.msra.mxu0 0
        %1372 = vmatprep.subr.bf16.mxu0 0
        %1373 = vmatpush1.bf16.msra.mxu0 0
        %1374 = vmatprep.subr.bf16.mxu0 0
        %1375 = vmatpush1.bf16.msra.mxu0 0
        %1376 = vmatprep.subr.bf16.mxu0 0
        %1377 = vmatpush1.bf16.msra.mxu0 0
        %1378 = vmatprep.subr.bf16.mxu0 0
        %1379 = vmatpush1.bf16.msra.mxu0 0
        %1380 = vmatprep.subr.bf16.mxu0 0
        %1381 = vmatpush1.bf16.msra.mxu0 0
        %1382 = vmatprep.subr.bf16.mxu0 0
        %1383 = vmatpush1.bf16.msra.mxu0 0
        %1384 = vmatprep.subr.bf16.mxu0 0
        %1385 = vmatpush1.bf16.msra.mxu0 0
        %1386 = vmatprep.subr.bf16.mxu0 0
        %1387 = vmatpush1.bf16.msra.mxu0 0
        %1388 = vmatprep.subr.bf16.mxu0 0
        %1389 = vmatpush1.bf16.msra.mxu0 0
        %1390 = vmatprep.subr.bf16.mxu0 0
        %1391 = vmatpush1.bf16.msra.mxu0 0
        %1392 = vmatprep.subr.bf16.mxu0 0
        %1393 = vmatpush1.bf16.msra.mxu0 0
        %1394 = vmatprep.subr.bf16.mxu0 0
        %1395 = vmatpush1.bf16.msra.mxu0 0
        %1396 = vmatprep.mubr.bf16.mxu0 0
        %1397 = vmatmul.mubr.bf16.gmra.mrb[0].mxu0 %v1356
        %v1398 = vpop.f32.mrb[0].mxu0
        %v1399 = vadd.f32 0.0, %v1398
        %v1400 = vpop.f32.mrb[0].mxu0
        %v1401 = vadd.f32 0.0, %v1400
        %v1402 = vpop.f32.mrb[0].mxu0
        %v1403 = vpop.f32.mrb[0].mxu0
        %1404 = vdwg.mxu0
        %v1405 = vadd.f32 %v1339, %v1399
        %v1406 = vadd.f32 %v1341, %v1401
        %v1407 = vmul.f32 %v803, %v1405
        %v1408 = vmul.f32 %v807, %v1406
        %v1409 = vadd.f32 %v1226, %v1407
        %v1410 = vadd.f32 %v1227, %v1408
        %s1411 = scalar_lea.vmem %s5, 8
        %v1412 = vld [vmem:[%s1411] sm:$0xf]
        %s1413 = scalar_lea.vmem %s5, 20
        %v1414 = vld [vmem:[%s1413] sm:$0xf]
        %1415 = vrot.lane.b32.xlu0 %v1047, 110
        %v1416 = vpop.permute.xlu0 %1415
        %1417 = vrot.lane.b32.xlu0 %v1048, 110
        %v1418 = vpop.permute.xlu0 %1417
        %1419 = vrot.lane.b32.xlu0 %v1049, 110
        %v1420 = vpop.permute.xlu0 %1419
        %v1421 = vsel %vm824, %v1416, %v1418
        %v1422 = vsel %vm824, %v1418, %v1420
        %v1424 = vsel %vm444, %v1414, 0
        %v1427 = vsel %vm448, %v1421, 0
        %v1430 = vsel %vm448, %v1422, 0
        %1432 = vmatprep.subr.bf16.mxu0 %v1430
        %1433 = vmatpush1.bf16.msra.mxu0 %v1427
        %1434 = vmatprep.subr.bf16.mxu0 0
        %1435 = vmatpush1.bf16.msra.mxu0 0
        %1436 = vmatprep.subr.bf16.mxu0 0
        %1437 = vmatpush1.bf16.msra.mxu0 0
        %1438 = vmatprep.subr.bf16.mxu0 0
        %1439 = vmatpush1.bf16.msra.mxu0 0
        %1440 = vmatprep.subr.bf16.mxu0 0
        %1441 = vmatpush1.bf16.msra.mxu0 0
        %1442 = vmatprep.subr.bf16.mxu0 0
        %1443 = vmatpush1.bf16.msra.mxu0 0
        %1444 = vmatprep.subr.bf16.mxu0 0
        %1445 = vmatpush1.bf16.msra.mxu0 0
        %1446 = vmatprep.subr.bf16.mxu0 0
        %1447 = vmatpush1.bf16.msra.mxu0 0
        %1448 = vmatprep.subr.bf16.mxu0 0
        %1449 = vmatpush1.bf16.msra.mxu0 0
        %1450 = vmatprep.subr.bf16.mxu0 0
        %1451 = vmatpush1.bf16.msra.mxu0 0
        %1452 = vmatprep.subr.bf16.mxu0 0
        %1453 = vmatpush1.bf16.msra.mxu0 0
        %1454 = vmatprep.subr.bf16.mxu0 0
        %1455 = vmatpush1.bf16.msra.mxu0 0
        %1456 = vmatprep.subr.bf16.mxu0 0
        %1457 = vmatpush1.bf16.msra.mxu0 0
        %1458 = vmatprep.subr.bf16.mxu0 0
        %1459 = vmatpush1.bf16.msra.mxu0 0
        %1460 = vmatprep.subr.bf16.mxu0 0
        %1461 = vmatpush1.bf16.msra.mxu0 0
        %1462 = vmatprep.subr.bf16.mxu0 0
        %1463 = vmatpush1.bf16.msra.mxu0 0
        %1464 = vmatprep.mubr.bf16.mxu0 0
        %1465 = vmatmul.mubr.bf16.gmra.mrb[0].mxu0 %v1424
        %v1466 = vpop.f32.mrb[0].mxu0
        %v1467 = vadd.f32 0.0, %v1466
        %v1468 = vpop.f32.mrb[0].mxu0
        %v1469 = vadd.f32 0.0, %v1468
        %v1470 = vpop.f32.mrb[0].mxu0
        %v1471 = vpop.f32.mrb[0].mxu0
        %1472 = vdwg.mxu0
        %1473 = vrot.lane.b32.xlu0 %v1047, 126
        %v1474 = vpop.permute.xlu0 %1473
        %1475 = vrot.lane.b32.xlu0 %v1048, 126
        %v1476 = vpop.permute.xlu0 %1475
        %1477 = vrot.lane.b32.xlu0 %v1049, 126
        %v1478 = vpop.permute.xlu0 %1477
        %v1479 = vsel %vm883, %v1474, %v1476
        %v1480 = vsel %vm883, %v1476, %v1478
        %v1482 = vsel %vm444, %v1412, 0
        %v1485 = vsel %vm448, %v1479, 0
        %v1488 = vsel %vm448, %v1480, 0
        %1490 = vmatprep.subr.bf16.mxu0 %v1488
        %1491 = vmatpush1.bf16.msra.mxu0 %v1485
        %1492 = vmatprep.subr.bf16.mxu0 0
        %1493 = vmatpush1.bf16.msra.mxu0 0
        %1494 = vmatprep.subr.bf16.mxu0 0
        %1495 = vmatpush1.bf16.msra.mxu0 0
        %1496 = vmatprep.subr.bf16.mxu0 0
        %1497 = vmatpush1.bf16.msra.mxu0 0
        %1498 = vmatprep.subr.bf16.mxu0 0
        %1499 = vmatpush1.bf16.msra.mxu0 0
        %1500 = vmatprep.subr.bf16.mxu0 0
        %1501 = vmatpush1.bf16.msra.mxu0 0
        %1502 = vmatprep.subr.bf16.mxu0 0
        %1503 = vmatpush1.bf16.msra.mxu0 0
        %1504 = vmatprep.subr.bf16.mxu0 0
        %1505 = vmatpush1.bf16.msra.mxu0 0
        %1506 = vmatprep.subr.bf16.mxu0 0
        %1507 = vmatpush1.bf16.msra.mxu0 0
        %1508 = vmatprep.subr.bf16.mxu0 0
        %1509 = vmatpush1.bf16.msra.mxu0 0
        %1510 = vmatprep.subr.bf16.mxu0 0
        %1511 = vmatpush1.bf16.msra.mxu0 0
        %1512 = vmatprep.subr.bf16.mxu0 0
        %1513 = vmatpush1.bf16.msra.mxu0 0
        %1514 = vmatprep.subr.bf16.mxu0 0
        %1515 = vmatpush1.bf16.msra.mxu0 0
        %1516 = vmatprep.subr.bf16.mxu0 0
        %1517 = vmatpush1.bf16.msra.mxu0 0
        %1518 = vmatprep.subr.bf16.mxu0 0
        %1519 = vmatpush1.bf16.msra.mxu0 0
        %1520 = vmatprep.subr.bf16.mxu0 0
        %1521 = vmatpush1.bf16.msra.mxu0 0
        %1522 = vmatprep.mubr.bf16.mxu0 0
        %1523 = vmatmul.mubr.bf16.gmra.mrb[0].mxu0 %v1482
        %v1524 = vpop.f32.mrb[0].mxu0
        %v1525 = vadd.f32 %v1467, %v1524
        %v1526 = vpop.f32.mrb[0].mxu0
        %v1527 = vadd.f32 %v1469, %v1526
        %v1528 = vpop.f32.mrb[0].mxu0
        %v1529 = vpop.f32.mrb[0].mxu0
        %1530 = vdwg.mxu0
        %s1531 = scalar_lea.vmem %s5, 32
        %v1532 = vld [vmem:[%s1531] sm:$0xf]
        %1533 = vrot.lane.b32.xlu0 %v1047, 94
        %v1534 = vpop.permute.xlu0 %1533
        %1535 = vrot.lane.b32.xlu0 %v1048, 94
        %v1536 = vpop.permute.xlu0 %1535
        %1537 = vrot.lane.b32.xlu0 %v1049, 94
        %v1538 = vpop.permute.xlu0 %1537
        %v1539 = vsel %vm944, %v1534, %v1536
        %v1540 = vsel %vm944, %v1536, %v1538
        %v1542 = vsel %vm444, %v1532, 0
        %v1545 = vsel %vm448, %v1539, 0
        %v1548 = vsel %vm448, %v1540, 0
        %1550 = vmatprep.subr.bf16.mxu0 %v1548
        %1551 = vmatpush1.bf16.msra.mxu0 %v1545
        %1552 = vmatprep.subr.bf16.mxu0 0
        %1553 = vmatpush1.bf16.msra.mxu0 0
        %1554 = vmatprep.subr.bf16.mxu0 0
        %1555 = vmatpush1.bf16.msra.mxu0 0
        %1556 = vmatprep.subr.bf16.mxu0 0
        %1557 = vmatpush1.bf16.msra.mxu0 0
        %1558 = vmatprep.subr.bf16.mxu0 0
        %1559 = vmatpush1.bf16.msra.mxu0 0
        %1560 = vmatprep.subr.bf16.mxu0 0
        %1561 = vmatpush1.bf16.msra.mxu0 0
        %1562 = vmatprep.subr.bf16.mxu0 0
        %1563 = vmatpush1.bf16.msra.mxu0 0
        %1564 = vmatprep.subr.bf16.mxu0 0
        %1565 = vmatpush1.bf16.msra.mxu0 0
        %1566 = vmatprep.subr.bf16.mxu0 0
        %1567 = vmatpush1.bf16.msra.mxu0 0
        %1568 = vmatprep.subr.bf16.mxu0 0
        %1569 = vmatpush1.bf16.msra.mxu0 0
        %1570 = vmatprep.subr.bf16.mxu0 0
        %1571 = vmatpush1.bf16.msra.mxu0 0
        %1572 = vmatprep.subr.bf16.mxu0 0
        %1573 = vmatpush1.bf16.msra.mxu0 0
        %1574 = vmatprep.subr.bf16.mxu0 0
        %1575 = vmatpush1.bf16.msra.mxu0 0
        %1576 = vmatprep.subr.bf16.mxu0 0
        %1577 = vmatpush1.bf16.msra.mxu0 0
        %1578 = vmatprep.subr.bf16.mxu0 0
        %1579 = vmatpush1.bf16.msra.mxu0 0
        %1580 = vmatprep.subr.bf16.mxu0 0
        %1581 = vmatpush1.bf16.msra.mxu0 0
        %1582 = vmatprep.mubr.bf16.mxu0 0
        %1583 = vmatmul.mubr.bf16.gmra.mrb[0].mxu0 %v1542
        %v1584 = vpop.f32.mrb[0].mxu0
        %v1585 = vadd.f32 0.0, %v1584
        %v1586 = vpop.f32.mrb[0].mxu0
        %v1587 = vadd.f32 0.0, %v1586
        %v1588 = vpop.f32.mrb[0].mxu0
        %v1589 = vpop.f32.mrb[0].mxu0
        %1590 = vdwg.mxu0
        %v1591 = vadd.f32 %v1525, %v1585
        %v1592 = vadd.f32 %v1527, %v1587
        %v1593 = vmul.f32 %v1003, %v1591
        %v1594 = vmul.f32 %v1007, %v1592
        %v1595 = vadd.f32 %v1409, %v1593
        %v1596 = vadd.f32 %v1410, %v1594
        %1598 = vset.pattern.permute.xlu0 0
        %1599 = vperm.xlu0 %1598, %v392
        %v1600 = vpop.permute.xlu0 %1599
        %v1602 = vadd.f32 %v1595, %v1600
        %v1603 = vadd.f32 %v1596, %v1600
        %v1604 = vadd.f32 %v1602, %v1603
        %1605 = vadd.xlane.f32.xlu0 %v1604
        %v1606 = vpop.xlane.xlu0 %1605
        %v1607 = vmul.f32 %v1606, 0.00390625
        %v1608 = vmul.f32 %v393, %v1607
        %vm1609 = vcmask 15360
        %v1610 = vsel %vm1609, %v1608, 0.0
        %v1611 = vrot.slane %v1610, 4
        %v1612 = vadd.f32 %v1610, %v1611
        %v1613 = vrot.slane %v1612, 2
        %v1614 = vadd.f32 %v1612, %v1613
        %v1615 = vrot.slane %v1614, 1
        %v1616 = vadd.f32 %v1614, %v1615
        %v1617 = vadd.f32 %v1616, %v394
        %v1618 = vmax.f32 %v1617, 0.0
        %v1619 = vlaneseq
        %v1620 = vshrl.u32 %v1619, 7
        %v1621 = vsub.s32 0, %v1620
        %v1622 = vrot.slane %v1618, %v1621
        %v1623 = vmul.f32 %v395, %v1622
        %v1624 = vmul.f32 %v396, %v1622
        %v1625 = vsel %vm1609, %v1623, 0.0
        %1626 = vadd.xlane.f32.xlu0 %v1625
        %v1627 = vpop.xlane.xlu0 %1626
        %v1628 = vsel %vm1609, %v1624, 0.0
        %1629 = vadd.xlane.f32.xlu0 %v1628
        %v1630 = vpop.xlane.xlu0 %1629
        %v1631 = vadd.f32 %v1627, %v397
        %v1632 = vadd.f32 %v1630, %v398
        %v1633 = vxor.u32 %v1631, 2147483648
        %v1634 = vmul.f32 %v1633, 1.442695
        %v1635 = vpow.pop %v1634
        %v1636 = vadd.f32 %v1635, 1.0
        %v1637 = vrcp.pop %v1636
        %v1638 = vmul.f32 1.0, %v1637
        %1640 = vset.pattern.permute.xlu0 0
        %1641 = vperm.xlu0 %1640, %v1638
        %v1642 = vpop.permute.xlu0 %1641
        %v1644 = vmul.f32 %v399, %v1642
        %v1645 = vmul.f32 %v400, %v1642
        %1647 = vset.pattern.permute.xlu0 0
        %1648 = vperm.xlu0 %1647, %v1632
        %v1649 = vpop.permute.xlu0 %1648
        %v1651 = vadd.f32 %v1644, %v1649
        %v1652 = vadd.f32 %v1645, %v1649
        %v1653 = vadd.f32 %v1651, %v399
        %v1654 = vadd.f32 %v1652, %v400
        %v1655 = vmax.f32 %v1653, 0.0
        %v1656 = vmax.f32 %v1654, 0.0
        %1657 = vst [vmem:[%s379] sm:$0xff] %v1655
        %1658 = vst [vmem:[%s379 + $0x8] sm:$0xff] %v1656
        %s1659 = sand.u32 %s269, 1
        %s1660 = scalar_lea.sflag [#allocation4], %s1659
        %s1661 = sand.u32 %s269, 1
        %s1662 = smul.addr %s1661, 16
        %s1663 = scalar_lea.vmem [#allocation3], %s1662
        // Predicated region
        $region65: #{tpu_custom_call.1} parent=63 // pred_check
          %p1664 = pneg %p279
        $region66: #{tpu_custom_call.1} parent=63 // pred_check_branch
          %1666 = sbr.rel (%p1664) target = $region68
        $region67: #{tpu_custom_call.1} parent=63 // pred_region
          %s1668 = ssub.s32 256, 256
          %1669 = vsyncadd %s1660, %s1668
          %s1670 = smul.addr %s25, 2
          %s1671 = smul.addr %s1670, 128
          %s1672 = scalar_lea.hbm %s11, %s1671
          %s1674 = sshll.u32 %s1663, 4
          %s1675 = int_to_ptr.vmem [resolvable:$true] %s1674
          %1677 = dma.vmem_to_hbm [thread:$0]  %s1675, 256, %s1672, %s1660
        $region68: #{tpu_custom_call.1} parent=63 // pred_fallthru
          _
      $region64: #{tpu_custom_call.1} parent=5 // pred_fallthru
        _
      %p1678 = scmp.le.s32.totalorder 2, %s20
      // Predicated region
      $region69: #{tpu_custom_call.1} parent=5 // pred_check
        %p1679 = pneg %p1678
      $region70: #{tpu_custom_call.1} parent=5 // pred_check_branch
        %1681 = sbr.rel (%p1679) target = $region72
      $region71: #{tpu_custom_call.1} parent=5 // pred_region
        %s1682 = ssub.s32 %s20, 2
        // Predicated region
        $region73: #{tpu_custom_call.1} parent=71 // pred_check
          %p1683 = pneg %p285
        $region74: #{tpu_custom_call.1} parent=71 // pred_check_branch
          %1685 = sbr.rel (%p1683) target = $region76
        $region75: #{tpu_custom_call.1} parent=71 // pred_region
          %s1686 = sand.u32 %s270, 1
          %s1687 = scalar_lea.sflag [#allocation4], %s1686
          %s1688 = sand.u32 %s270, 1
          %s1689 = smul.addr %s1688, 16
          %s1690 = scalar_lea.vmem [#allocation3], %s1689
          %1691 = dma.done %s1687, 256
        $region76: #{tpu_custom_call.1} parent=71 // pred_fallthru
          _
      $region72: #{tpu_custom_call.1} parent=5 // pred_fallthru
        _
    $region6: #{tpu_custom_call.1} parent=1 // loop_footer
      %s24 = sadd.s32 1, %s20
    $region7: #{tpu_custom_call.1} parent=1 // loop_footer_branch
      %19 = sbr.rel target = $region3
    $region8: #{tpu_custom_call.1} parent=1 // loop_exit
      _
    %1692 = vsyncpa [#allocation4], 1
    %s1693 = scalar_lea.sflag [#allocation4], 1
    %1694 = vsyncpa %s1693, 1

</llo_original>
